<compile_context>
chip_gen: v5e
topology: v5e:2x2
jax: 0.10.0
libtpu: 0.0.40
codegen_flags: <defaults>
</compile_context>

<pallas_src>
import math

import jax
import jax.numpy as jnp
from jax.experimental import pallas as pl
from jax.experimental.pallas import tpu as pltpu

# ---------------------------------------------------------------------------
# Model hyper-parameters (small, synthetic "transformer encoder")
# ---------------------------------------------------------------------------
MAX_ID = 6        # number of labels (entities)
SEQ = 8           # max_length after tokenization (incl. CLS)
HIDDEN = 32       # transformer hidden size -> representation shape = (HIDDEN,)
NUM_HEADS = 2
HEAD_DIM = HIDDEN // NUM_HEADS
FFN = 64
VOCAB = 32
NEG_INF = -1e9
LN_EPS = 1e-12

B_TILE = 4        # labels processed per grid step (n_labels padded to a multiple)


def _layernorm(x, gamma, beta):
    mu = jnp.mean(x, axis=-1, keepdims=True)
    var = jnp.mean((x - mu) ** 2, axis=-1, keepdims=True)
    return (x - mu) * jax.lax.rsqrt(var + LN_EPS) * gamma + beta


# ---------------------------------------------------------------------------
# Shared encoder math (pure arrays). Used by BOTH the Pallas kernel body and the
# plain-JAX reference, so correctness is checked against the exact same formula.
# ---------------------------------------------------------------------------
def _encoder_math(x3, mask, wqkv, bqkv, wo, w1, b1, w2, wp, vec):
    """x3: (B, S, H), mask: (B, 1, S) -> pooled (B, H), all float32."""
    B = x3.shape[0]
    x2 = x3.reshape(B * SEQ, HIDDEN)                 # leading-dim reshape (free)
    bias = (1.0 - mask) * NEG_INF                    # (B, 1, S), broadcasts over queries

    bo = vec[0:1, :]
    ln1g = vec[1:2, :]
    ln1b = vec[2:3, :]
    b2 = vec[3:4, :]
    ln2g = vec[4:5, :]
    ln2b = vec[5:6, :]
    bp = vec[6:7, :]

    scale = 1.0 / math.sqrt(HEAD_DIM)

    # --- multi-head self attention (batched over the B labels, per head) ---
    attn2 = jnp.zeros((B * SEQ, HIDDEN), jnp.float32)
    for h in range(NUM_HEADS):
        def proj(j, _h=h):
            r = j * NUM_HEADS + _h
            return (
                jnp.dot(x2, wqkv[r], preferred_element_type=jnp.float32)
                + bqkv[r:r + 1, :]
            )
        q3 = proj(0).reshape(B, SEQ, HEAD_DIM)
        k3 = proj(1).reshape(B, SEQ, HEAD_DIM)
        v3 = proj(2).reshape(B, SEQ, HEAD_DIM)

        s = jnp.einsum("bqd,bkd->bqk", q3, k3,
                       preferred_element_type=jnp.float32) * scale
        s = s + bias                                 # mask padded keys
        p = jax.nn.softmax(s, axis=-1)
        ctx3 = jnp.einsum("bqk,bkd->bqd", p, v3,
                          preferred_element_type=jnp.float32)
        # sum per-head W_O slices instead of concatenating heads on the lane axis
        attn2 = attn2 + jnp.dot(ctx3.reshape(B * SEQ, HEAD_DIM), wo[h],
                                preferred_element_type=jnp.float32)
    attn2 = attn2 + bo

    h1 = _layernorm(x2 + attn2, ln1g, ln1b)          # (B*S, H)

    # --- feed-forward ---
    ff = jnp.dot(h1, w1, preferred_element_type=jnp.float32) + b1
    # NOTE: tanh-approx GELU (HF BERT default is exact erf GELU; tanh form keeps the
    # kernel on well-supported EUP ops and the reference uses the same formula).
    ff = jax.nn.gelu(ff, approximate=True)
    ff = jnp.dot(ff, w2, preferred_element_type=jnp.float32) + b2

    h2 = _layernorm(h1 + ff, ln2g, ln2b)             # (B*S, H)

    # --- BERT-style pooler on the CLS (position 0) token, batched over labels ---
    cls = h2.reshape(B, SEQ, HIDDEN)[:, 0:1, :].reshape(B, HIDDEN)   # (B, H)
    pooled = jnp.tanh(
        jnp.dot(cls, wp, preferred_element_type=jnp.float32) + bp
    )
    return pooled                                    # (B, H)


# ---------------------------------------------------------------------------
# Pallas kernel: one grid step = B_TILE labels' full encoder layer + pooler
# ---------------------------------------------------------------------------
def encoder_kernel(
    x_ref,        # (B_TILE, S, H)      embedded tokens for B_TILE labels
    mask_ref,     # (B_TILE, 1, S)      attention mask (1.0 = real token, 0.0 = pad)
    wqkv_ref,     # (3*NUM_HEADS, H, HEAD_DIM)   per-head q/k/v projections
    bqkv_ref,     # (3*NUM_HEADS, HEAD_DIM)
    wo_ref,       # (NUM_HEADS, HEAD_DIM, H)
    w1_ref,       # (H, F)
    b1_ref,       # (1, F)
    w2_ref,       # (F, H)
    wp_ref,       # (H, H)              pooler
    vec_ref,      # (8, H)  rows: bo, ln1g, ln1b, b2, ln2g, ln2b, bp, unused
    out_ref,      # (B_TILE, 1, H)
):
    pooled = _encoder_math(
        x_ref[...], mask_ref[...],
        wqkv_ref[...], bqkv_ref[...], wo_ref[...],
        w1_ref[...], b1_ref[...], w2_ref[...], wp_ref[...], vec_ref[...],
    )
    out_ref[...] = pooled.reshape(B_TILE, 1, HIDDEN)


def encode_all(x_all, mask_all, params):
    """x_all: (L, S, H) f32, mask_all: (L, 1, S) f32, L % B_TILE == 0 -> (L, H)."""
    n_labels = x_all.shape[0]
    assert n_labels % B_TILE == 0

    def invariant_spec(shape):
        nd = len(shape)
        return pl.BlockSpec(shape, lambda i, _nd=nd: (0,) * _nd)

    in_specs = [
        pl.BlockSpec((B_TILE, SEQ, HIDDEN), lambda i: (i, 0, 0)),   # x
        pl.BlockSpec((B_TILE, 1, SEQ), lambda i: (i, 0, 0)),        # mask
    ] + [invariant_spec(p.shape) for p in params]

    out = pl.pallas_call(
        encoder_kernel,
        out_shape=jax.ShapeDtypeStruct((n_labels, 1, HIDDEN), jnp.float32),
        grid=(n_labels // B_TILE,),
        in_specs=in_specs,
        out_specs=pl.BlockSpec((B_TILE, 1, HIDDEN), lambda i: (i, 0, 0)),
        compiler_params=pltpu.CompilerParams(dimension_semantics=("parallel",)),
    )(x_all, mask_all, *params)
    return out[:, 0, :]


# ---------------------------------------------------------------------------
# Deterministic synthetic "model": labels -> token ids, embeddings, weights
# ---------------------------------------------------------------------------
def tokenize(labels):
    """Deterministic toy tokenizer: CLS + per-character ids, padded to SEQ."""
    tok, msk = [], []
    for lab in labels:
        ids = [1] + [2 + (ord(c) % (VOCAB - 2)) for c in lab]   # 0 = PAD, 1 = CLS
        ids = ids[:SEQ]
        m = [1.0] * len(ids)
        ids = ids + [0] * (SEQ - len(ids))
        m = m + [0.0] * (SEQ - len(m))
        tok.append(ids)
        msk.append(m)
    return jnp.array(tok, dtype=jnp.int32), jnp.array(msk, dtype=jnp.float32)


def pad_labels(token_ids, attn_mask):
    """Pad label count to a multiple of B_TILE with valid CLS-only rows."""
    n = token_ids.shape[0]
    n_pad = ((n + B_TILE - 1) // B_TILE) * B_TILE
    if n_pad == n:
        return token_ids, attn_mask
    extra = n_pad - n
    pad_tok = jnp.zeros((extra, SEQ), jnp.int32).at[:, 0].set(1)
    pad_msk = jnp.zeros((extra, SEQ), jnp.float32).at[:, 0].set(1.0)
    return (jnp.concatenate([token_ids, pad_tok], axis=0),
            jnp.concatenate([attn_mask, pad_msk], axis=0))


def init_params(key):
    ks = jax.random.split(key, 8)
    s = 0.02
    token_emb = s * jax.random.normal(ks[0], (VOCAB, HIDDEN), jnp.float32)
    pos_emb = s * jax.random.normal(ks[1], (SEQ, HIDDEN), jnp.float32)
    # per-head q/k/v projection weights: row index = proj * NUM_HEADS + head
    wqkv = s * jax.random.normal(ks[2], (3 * NUM_HEADS, HIDDEN, HEAD_DIM), jnp.float32)
    bqkv = jnp.zeros((3 * NUM_HEADS, HEAD_DIM), jnp.float32)
    wo = s * jax.random.normal(ks[3], (NUM_HEADS, HEAD_DIM, HIDDEN), jnp.float32)
    w1 = s * jax.random.normal(ks[4], (HIDDEN, FFN), jnp.float32)
    b1 = jnp.zeros((1, FFN), jnp.float32)
    w2 = s * jax.random.normal(ks[5], (FFN, HIDDEN), jnp.float32)
    wp = s * jax.random.normal(ks[6], (HIDDEN, HIDDEN), jnp.float32)
    # packed (1,H) vectors: 0 bo, 1 ln1_gamma, 2 ln1_beta, 3 b2, 4 ln2_gamma,
    #                       5 ln2_beta, 6 bp, 7 unused
    vec = (jnp.zeros((8, HIDDEN), jnp.float32).at[1].set(1.0).at[4].set(1.0))
    kernel_params = (wqkv, bqkv, wo, w1, b1, w2, wp, vec)
    return token_emb, pos_emb, kernel_params


# ---------------------------------------------------------------------------
# Full forward, matching LabelBasedTransformerRepresentation.forward
# ---------------------------------------------------------------------------
@jax.jit
def _forward_flat_jit(flat_indices, token_ids_pad, attn_mask_pad,
                      token_emb, pos_emb, *kernel_params):
    # Encode ALL labels (static shapes -> single Mosaic compile), then gather.
    # Output-equivalent to the torch module's unique()/inverse path.
    x_all = (token_emb[token_ids_pad] + pos_emb[None, :, :]).astype(jnp.float32)
    mask_all = attn_mask_pad[:, None, :].astype(jnp.float32)
    pooled_all = encode_all(x_all, mask_all, kernel_params)        # (L_pad, H)
    return pooled_all[flat_indices]                                 # (len(flat), H)


def label_based_transformer_forward(indices, token_ids_pad, attn_mask_pad,
                                    token_emb, pos_emb, kernel_params):
    if indices is None:
        indices = jnp.arange(MAX_ID, dtype=jnp.int32)
    flat = indices.reshape(-1)
    out_flat = _forward_flat_jit(flat, token_ids_pad, attn_mask_pad,
                                 token_emb, pos_emb, *kernel_params)
    return out_flat.reshape(tuple(indices.shape) + (HIDDEN,))


if __name__ == "__main__":
    key = jax.random.PRNGKey(0)
    labels = [f"entity_{i}" for i in range(MAX_ID)]
    token_ids, attn_mask = tokenize(labels)
    token_ids_pad, attn_mask_pad = pad_labels(token_ids, attn_mask)
    token_emb, pos_emb, kernel_params = init_params(key)

    # 2-D index tensor (as used by fast sLCWA scoring), with repeated indices.
    indices = jnp.array([[3, 1, 2], [1, 4, 3]], dtype=jnp.int32)

    out = label_based_transformer_forward(
        indices, token_ids_pad, attn_mask_pad, token_emb, pos_emb, kernel_params
    )
    jax.block_until_ready(out)
    assert out.shape == (2, 3, HIDDEN), out.shape

    # indices=None  ->  arange(max_id)
    out_all = label_based_transformer_forward(
        None, token_ids_pad, attn_mask_pad, token_emb, pos_emb, kernel_params
    )
    jax.block_until_ready(out_all)
    assert out_all.shape == (MAX_ID, HIDDEN), out_all.shape

    # repeated indices must map to identical representations
    assert bool(jnp.allclose(out[0, 1], out[1, 0]))   # both index 1
    assert bool(jnp.allclose(out[0, 0], out[1, 2]))   # both index 3

    # pure-JAX (XLA) reference of the exact same math vs. the Pallas (Mosaic) kernel
    x_ref_in = (token_emb[token_ids_pad] + pos_emb[None, :, :]).astype(jnp.float32)
    mask_ref_in = attn_mask_pad[:, None, :].astype(jnp.float32)
    ref_pooled = _encoder_math(x_ref_in, mask_ref_in, *kernel_params)
    assert bool(jnp.allclose(out_all, ref_pooled[:MAX_ID], atol=2e-3, rtol=2e-3))

    print("KERNEL_OK")
</pallas_src>

<mosaic_0001>
module attributes {stable_mosaic.version = 11 : i64} {
  func.func @encoder_kernel(%arg0: i32, %arg1: memref<4x8x32xf32, #tpu.memory_space<vmem>>, %arg2: memref<4x1x8xf32, #tpu.memory_space<vmem>>, %arg3: memref<6x32x16xf32, #tpu.memory_space<vmem>>, %arg4: memref<6x16xf32, #tpu.memory_space<vmem>>, %arg5: memref<2x16x32xf32, #tpu.memory_space<vmem>>, %arg6: memref<32x64xf32, #tpu.memory_space<vmem>>, %arg7: memref<1x64xf32, #tpu.memory_space<vmem>>, %arg8: memref<64x32xf32, #tpu.memory_space<vmem>>, %arg9: memref<32x32xf32, #tpu.memory_space<vmem>>, %arg10: memref<8x32xf32, #tpu.memory_space<vmem>>, %arg11: memref<4x1x32xf32, #tpu.memory_space<vmem>>) attributes {dimension_semantics = [#tpu.dimension_semantics<parallel>], iteration_bounds = array<i64: 2>, scalar_prefetch = 0 : i64, scratch_operands = 0 : i64, tpu.core_type = #tpu.core_type<tc>, window_params = [{transform_indices = @transform_0, window_bounds = array<i64: 4, 8, 32>}, {transform_indices = @transform_1, window_bounds = array<i64: 4, 1, 8>}, {pipeline_mode = #tpu.pipeline_mode<synchronous>, transform_indices = @transform_2, window_bounds = array<i64: 6, 32, 16>}, {pipeline_mode = #tpu.pipeline_mode<synchronous>, transform_indices = @transform_3, window_bounds = array<i64: 6, 16>}, {pipeline_mode = #tpu.pipeline_mode<synchronous>, transform_indices = @transform_4, window_bounds = array<i64: 2, 16, 32>}, {pipeline_mode = #tpu.pipeline_mode<synchronous>, transform_indices = @transform_5, window_bounds = array<i64: 32, 64>}, {pipeline_mode = #tpu.pipeline_mode<synchronous>, transform_indices = @transform_6, window_bounds = array<i64: 1, 64>}, {pipeline_mode = #tpu.pipeline_mode<synchronous>, transform_indices = @transform_7, window_bounds = array<i64: 64, 32>}, {pipeline_mode = #tpu.pipeline_mode<synchronous>, transform_indices = @transform_8, window_bounds = array<i64: 32, 32>}, {pipeline_mode = #tpu.pipeline_mode<synchronous>, transform_indices = @transform_9, window_bounds = array<i64: 8, 32>}, {transform_indices = @transform_10, window_bounds = array<i64: 4, 1, 32>}]} {
    %c0 = arith.constant 0 : index
    %c0_0 = arith.constant 0 : index
    %c0_1 = arith.constant 0 : index
    %0 = vector.load %arg1[%c0, %c0_0, %c0_1] : memref<4x8x32xf32, #tpu.memory_space<vmem>>, vector<4x8x32xf32>
    %c0_2 = arith.constant 0 : index
    %c0_3 = arith.constant 0 : index
    %c0_4 = arith.constant 0 : index
    %1 = vector.load %arg2[%c0_2, %c0_3, %c0_4] : memref<4x1x8xf32, #tpu.memory_space<vmem>>, vector<4x1x8xf32>
    %c0_5 = arith.constant 0 : index
    %c0_6 = arith.constant 0 : index
    %c0_7 = arith.constant 0 : index
    %2 = vector.load %arg3[%c0_5, %c0_6, %c0_7] : memref<6x32x16xf32, #tpu.memory_space<vmem>>, vector<6x32x16xf32>
    %c0_8 = arith.constant 0 : index
    %c0_9 = arith.constant 0 : index
    %3 = vector.load %arg4[%c0_8, %c0_9] : memref<6x16xf32, #tpu.memory_space<vmem>>, vector<6x16xf32>
    %c0_10 = arith.constant 0 : index
    %c0_11 = arith.constant 0 : index
    %c0_12 = arith.constant 0 : index
    %4 = vector.load %arg5[%c0_10, %c0_11, %c0_12] : memref<2x16x32xf32, #tpu.memory_space<vmem>>, vector<2x16x32xf32>
    %c0_13 = arith.constant 0 : index
    %c0_14 = arith.constant 0 : index
    %5 = vector.load %arg6[%c0_13, %c0_14] : memref<32x64xf32, #tpu.memory_space<vmem>>, vector<32x64xf32>
    %c0_15 = arith.constant 0 : index
    %c0_16 = arith.constant 0 : index
    %6 = vector.load %arg7[%c0_15, %c0_16] : memref<1x64xf32, #tpu.memory_space<vmem>>, vector<1x64xf32>
    %c0_17 = arith.constant 0 : index
    %c0_18 = arith.constant 0 : index
    %7 = vector.load %arg8[%c0_17, %c0_18] : memref<64x32xf32, #tpu.memory_space<vmem>>, vector<64x32xf32>
    %c0_19 = arith.constant 0 : index
    %c0_20 = arith.constant 0 : index
    %8 = vector.load %arg9[%c0_19, %c0_20] : memref<32x32xf32, #tpu.memory_space<vmem>>, vector<32x32xf32>
    %c0_21 = arith.constant 0 : index
    %c0_22 = arith.constant 0 : index
    %9 = vector.load %arg10[%c0_21, %c0_22] : memref<8x32xf32, #tpu.memory_space<vmem>>, vector<8x32xf32>
    %10 = vector.shape_cast %0 : vector<4x8x32xf32> to vector<32x32xf32>
    %cst = arith.constant 1.000000e+00 : f32
    %11 = vector.broadcast %cst : f32 to vector<4x1x8xf32>
    %12 = arith.subf %11, %1 : vector<4x1x8xf32>
    %cst_23 = arith.constant -1.000000e+09 : f32
    %13 = vector.broadcast %cst_23 : f32 to vector<4x1x8xf32>
    %14 = arith.mulf %12, %13 : vector<4x1x8xf32>
    %15 = vector.extract_strided_slice %9 {offsets = [0, 0], sizes = [1, 32], strides = [1, 1]} : vector<8x32xf32> to vector<1x32xf32>
    %16 = vector.extract_strided_slice %9 {offsets = [1, 0], sizes = [1, 32], strides = [1, 1]} : vector<8x32xf32> to vector<1x32xf32>
    %17 = vector.extract_strided_slice %9 {offsets = [2, 0], sizes = [1, 32], strides = [1, 1]} : vector<8x32xf32> to vector<1x32xf32>
    %18 = vector.extract_strided_slice %9 {offsets = [3, 0], sizes = [1, 32], strides = [1, 1]} : vector<8x32xf32> to vector<1x32xf32>
    %19 = vector.extract_strided_slice %9 {offsets = [4, 0], sizes = [1, 32], strides = [1, 1]} : vector<8x32xf32> to vector<1x32xf32>
    %20 = vector.extract_strided_slice %9 {offsets = [5, 0], sizes = [1, 32], strides = [1, 1]} : vector<8x32xf32> to vector<1x32xf32>
    %21 = vector.extract_strided_slice %9 {offsets = [6, 0], sizes = [1, 32], strides = [1, 1]} : vector<8x32xf32> to vector<1x32xf32>
    %cst_24 = arith.constant 0.000000e+00 : f32
    %22 = vector.broadcast %cst_24 : f32 to vector<32x32xf32>
    %23 = vector.extract_strided_slice %2 {offsets = [0, 0, 0], sizes = [1, 32, 16], strides = [1, 1, 1]} : vector<6x32x16xf32> to vector<1x32x16xf32>
    %24 = vector.shape_cast %23 : vector<1x32x16xf32> to vector<32x16xf32>
    %cst_25 = arith.constant dense<0.000000e+00> : vector<32x16xf32>
    %25 = tpu.matmul %10, %24, %cst_25 {dimension_numbers = #tpu.dot_dimension_numbers<[1], [0], [0], [1], [0, 0, 1, 1], [], []>} : vector<32x32xf32>, vector<32x16xf32>, vector<32x16xf32> -> vector<32x16xf32>
    %26 = vector.extract_strided_slice %3 {offsets = [0, 0], sizes = [1, 16], strides = [1, 1]} : vector<6x16xf32> to vector<1x16xf32>
    %27 = vector.broadcast %26 : vector<1x16xf32> to vector<32x16xf32>
    %28 = arith.addf %25, %27 : vector<32x16xf32>
    %29 = vector.shape_cast %28 : vector<32x16xf32> to vector<4x8x16xf32>
    %30 = vector.extract_strided_slice %2 {offsets = [2, 0, 0], sizes = [1, 32, 16], strides = [1, 1, 1]} : vector<6x32x16xf32> to vector<1x32x16xf32>
    %31 = vector.shape_cast %30 : vector<1x32x16xf32> to vector<32x16xf32>
    %cst_26 = arith.constant dense<0.000000e+00> : vector<32x16xf32>
    %32 = tpu.matmul %10, %31, %cst_26 {dimension_numbers = #tpu.dot_dimension_numbers<[1], [0], [0], [1], [0, 0, 1, 1], [], []>} : vector<32x32xf32>, vector<32x16xf32>, vector<32x16xf32> -> vector<32x16xf32>
    %33 = vector.extract_strided_slice %3 {offsets = [2, 0], sizes = [1, 16], strides = [1, 1]} : vector<6x16xf32> to vector<1x16xf32>
    %34 = vector.broadcast %33 : vector<1x16xf32> to vector<32x16xf32>
    %35 = arith.addf %32, %34 : vector<32x16xf32>
    %36 = vector.shape_cast %35 : vector<32x16xf32> to vector<4x8x16xf32>
    %37 = vector.extract_strided_slice %2 {offsets = [4, 0, 0], sizes = [1, 32, 16], strides = [1, 1, 1]} : vector<6x32x16xf32> to vector<1x32x16xf32>
    %38 = vector.shape_cast %37 : vector<1x32x16xf32> to vector<32x16xf32>
    %cst_27 = arith.constant dense<0.000000e+00> : vector<32x16xf32>
    %39 = tpu.matmul %10, %38, %cst_27 {dimension_numbers = #tpu.dot_dimension_numbers<[1], [0], [0], [1], [0, 0, 1, 1], [], []>} : vector<32x32xf32>, vector<32x16xf32>, vector<32x16xf32> -> vector<32x16xf32>
    %40 = vector.extract_strided_slice %3 {offsets = [4, 0], sizes = [1, 16], strides = [1, 1]} : vector<6x16xf32> to vector<1x16xf32>
    %41 = vector.broadcast %40 : vector<1x16xf32> to vector<32x16xf32>
    %42 = arith.addf %39, %41 : vector<32x16xf32>
    %43 = vector.shape_cast %42 : vector<32x16xf32> to vector<4x8x16xf32>
    "tpu.trace_start"() <{level = 10 : i32, message = "bqd,bkd->bqk"}> : () -> ()
    %cst_28 = arith.constant dense<0.000000e+00> : vector<4x8x8xf32>
    %44 = tpu.matmul %29, %36, %cst_28 {dimension_numbers = #tpu.dot_dimension_numbers<[2], [2], [1], [1], [0, 0, 0, 1, 1, 1], [0], [0]>} : vector<4x8x16xf32>, vector<4x8x16xf32>, vector<4x8x8xf32> -> vector<4x8x8xf32>
    "tpu.trace_stop"() : () -> ()
    %cst_29 = arith.constant 2.500000e-01 : f32
    %45 = vector.broadcast %cst_29 : f32 to vector<4x8x8xf32>
    %46 = arith.mulf %44, %45 : vector<4x8x8xf32>
    %47 = vector.broadcast %14 : vector<4x1x8xf32> to vector<4x8x8xf32>
    %48 = arith.addf %46, %47 : vector<4x8x8xf32>
    %cst_30 = arith.constant dense<0xFF800000> : vector<4x8xf32>
    %49 = vector.multi_reduction <maximumf>, %48, %cst_30 [2] : vector<4x8x8xf32> to vector<4x8xf32>
    %cst_31 = arith.constant 0xFF800000 : f32
    %50 = vector.broadcast %cst_31 : f32 to vector<4x8xf32>
    %51 = arith.maximumf %50, %49 : vector<4x8xf32>
    %52 = vector.shape_cast %51 : vector<4x8xf32> to vector<4x8x1xf32>
    %53 = vector.broadcast %52 : vector<4x8x1xf32> to vector<4x8x8xf32>
    %54 = arith.subf %48, %53 : vector<4x8x8xf32>
    %55 = math.exp %54 : vector<4x8x8xf32>
    %cst_32 = arith.constant dense<0.000000e+00> : vector<4x8xf32>
    %56 = vector.multi_reduction <add>, %55, %cst_32 [2] : vector<4x8x8xf32> to vector<4x8xf32>
    %57 = vector.shape_cast %56 : vector<4x8xf32> to vector<4x8x1xf32>
    %58 = vector.broadcast %57 : vector<4x8x1xf32> to vector<4x8x8xf32>
    %59 = arith.divf %55, %58 : vector<4x8x8xf32>
    "tpu.trace_start"() <{level = 10 : i32, message = "bqk,bkd->bqd"}> : () -> ()
    %cst_33 = arith.constant dense<0.000000e+00> : vector<4x8x16xf32>
    %60 = tpu.matmul %59, %43, %cst_33 {dimension_numbers = #tpu.dot_dimension_numbers<[2], [1], [1], [2], [0, 0, 0, 1, 1, 2], [0], [0]>} : vector<4x8x8xf32>, vector<4x8x16xf32>, vector<4x8x16xf32> -> vector<4x8x16xf32>
    "tpu.trace_stop"() : () -> ()
    %61 = vector.shape_cast %60 : vector<4x8x16xf32> to vector<32x16xf32>
    %62 = vector.extract_strided_slice %4 {offsets = [0, 0, 0], sizes = [1, 16, 32], strides = [1, 1, 1]} : vector<2x16x32xf32> to vector<1x16x32xf32>
    %63 = vector.shape_cast %62 : vector<1x16x32xf32> to vector<16x32xf32>
    %cst_34 = arith.constant dense<0.000000e+00> : vector<32x32xf32>
    %64 = tpu.matmul %61, %63, %cst_34 {dimension_numbers = #tpu.dot_dimension_numbers<[1], [0], [0], [1], [0, 0, 1, 1], [], []>} : vector<32x16xf32>, vector<16x32xf32>, vector<32x32xf32> -> vector<32x32xf32>
    %65 = arith.addf %22, %64 : vector<32x32xf32>
    %66 = vector.extract_strided_slice %2 {offsets = [1, 0, 0], sizes = [1, 32, 16], strides = [1, 1, 1]} : vector<6x32x16xf32> to vector<1x32x16xf32>
    %67 = vector.shape_cast %66 : vector<1x32x16xf32> to vector<32x16xf32>
    %cst_35 = arith.constant dense<0.000000e+00> : vector<32x16xf32>
    %68 = tpu.matmul %10, %67, %cst_35 {dimension_numbers = #tpu.dot_dimension_numbers<[1], [0], [0], [1], [0, 0, 1, 1], [], []>} : vector<32x32xf32>, vector<32x16xf32>, vector<32x16xf32> -> vector<32x16xf32>
    %69 = vector.extract_strided_slice %3 {offsets = [1, 0], sizes = [1, 16], strides = [1, 1]} : vector<6x16xf32> to vector<1x16xf32>
    %70 = vector.broadcast %69 : vector<1x16xf32> to vector<32x16xf32>
    %71 = arith.addf %68, %70 : vector<32x16xf32>
    %72 = vector.shape_cast %71 : vector<32x16xf32> to vector<4x8x16xf32>
    %73 = vector.extract_strided_slice %2 {offsets = [3, 0, 0], sizes = [1, 32, 16], strides = [1, 1, 1]} : vector<6x32x16xf32> to vector<1x32x16xf32>
    %74 = vector.shape_cast %73 : vector<1x32x16xf32> to vector<32x16xf32>
    %cst_36 = arith.constant dense<0.000000e+00> : vector<32x16xf32>
    %75 = tpu.matmul %10, %74, %cst_36 {dimension_numbers = #tpu.dot_dimension_numbers<[1], [0], [0], [1], [0, 0, 1, 1], [], []>} : vector<32x32xf32>, vector<32x16xf32>, vector<32x16xf32> -> vector<32x16xf32>
    %76 = vector.extract_strided_slice %3 {offsets = [3, 0], sizes = [1, 16], strides = [1, 1]} : vector<6x16xf32> to vector<1x16xf32>
    %77 = vector.broadcast %76 : vector<1x16xf32> to vector<32x16xf32>
    %78 = arith.addf %75, %77 : vector<32x16xf32>
    %79 = vector.shape_cast %78 : vector<32x16xf32> to vector<4x8x16xf32>
    %80 = vector.extract_strided_slice %2 {offsets = [5, 0, 0], sizes = [1, 32, 16], strides = [1, 1, 1]} : vector<6x32x16xf32> to vector<1x32x16xf32>
    %81 = vector.shape_cast %80 : vector<1x32x16xf32> to vector<32x16xf32>
    %cst_37 = arith.constant dense<0.000000e+00> : vector<32x16xf32>
    %82 = tpu.matmul %10, %81, %cst_37 {dimension_numbers = #tpu.dot_dimension_numbers<[1], [0], [0], [1], [0, 0, 1, 1], [], []>} : vector<32x32xf32>, vector<32x16xf32>, vector<32x16xf32> -> vector<32x16xf32>
    %83 = vector.extract_strided_slice %3 {offsets = [5, 0], sizes = [1, 16], strides = [1, 1]} : vector<6x16xf32> to vector<1x16xf32>
    %84 = vector.broadcast %83 : vector<1x16xf32> to vector<32x16xf32>
    %85 = arith.addf %82, %84 : vector<32x16xf32>
    %86 = vector.shape_cast %85 : vector<32x16xf32> to vector<4x8x16xf32>
    "tpu.trace_start"() <{level = 10 : i32, message = "bqd,bkd->bqk"}> : () -> ()
    %cst_38 = arith.constant dense<0.000000e+00> : vector<4x8x8xf32>
    %87 = tpu.matmul %72, %79, %cst_38 {dimension_numbers = #tpu.dot_dimension_numbers<[2], [2], [1], [1], [0, 0, 0, 1, 1, 1], [0], [0]>} : vector<4x8x16xf32>, vector<4x8x16xf32>, vector<4x8x8xf32> -> vector<4x8x8xf32>
    "tpu.trace_stop"() : () -> ()
    %cst_39 = arith.constant 2.500000e-01 : f32
    %88 = vector.broadcast %cst_39 : f32 to vector<4x8x8xf32>
    %89 = arith.mulf %87, %88 : vector<4x8x8xf32>
    %90 = vector.broadcast %14 : vector<4x1x8xf32> to vector<4x8x8xf32>
    %91 = arith.addf %89, %90 : vector<4x8x8xf32>
    %cst_40 = arith.constant dense<0xFF800000> : vector<4x8xf32>
    %92 = vector.multi_reduction <maximumf>, %91, %cst_40 [2] : vector<4x8x8xf32> to vector<4x8xf32>
    %cst_41 = arith.constant 0xFF800000 : f32
    %93 = vector.broadcast %cst_41 : f32 to vector<4x8xf32>
    %94 = arith.maximumf %93, %92 : vector<4x8xf32>
    %95 = vector.shape_cast %94 : vector<4x8xf32> to vector<4x8x1xf32>
    %96 = vector.broadcast %95 : vector<4x8x1xf32> to vector<4x8x8xf32>
    %97 = arith.subf %91, %96 : vector<4x8x8xf32>
    %98 = math.exp %97 : vector<4x8x8xf32>
    %cst_42 = arith.constant dense<0.000000e+00> : vector<4x8xf32>
    %99 = vector.multi_reduction <add>, %98, %cst_42 [2] : vector<4x8x8xf32> to vector<4x8xf32>
    %100 = vector.shape_cast %99 : vector<4x8xf32> to vector<4x8x1xf32>
    %101 = vector.broadcast %100 : vector<4x8x1xf32> to vector<4x8x8xf32>
    %102 = arith.divf %98, %101 : vector<4x8x8xf32>
    "tpu.trace_start"() <{level = 10 : i32, message = "bqk,bkd->bqd"}> : () -> ()
    %cst_43 = arith.constant dense<0.000000e+00> : vector<4x8x16xf32>
    %103 = tpu.matmul %102, %86, %cst_43 {dimension_numbers = #tpu.dot_dimension_numbers<[2], [1], [1], [2], [0, 0, 0, 1, 1, 2], [0], [0]>} : vector<4x8x8xf32>, vector<4x8x16xf32>, vector<4x8x16xf32> -> vector<4x8x16xf32>
    "tpu.trace_stop"() : () -> ()
    %104 = vector.shape_cast %103 : vector<4x8x16xf32> to vector<32x16xf32>
    %105 = vector.extract_strided_slice %4 {offsets = [1, 0, 0], sizes = [1, 16, 32], strides = [1, 1, 1]} : vector<2x16x32xf32> to vector<1x16x32xf32>
    %106 = vector.shape_cast %105 : vector<1x16x32xf32> to vector<16x32xf32>
    %cst_44 = arith.constant dense<0.000000e+00> : vector<32x32xf32>
    %107 = tpu.matmul %104, %106, %cst_44 {dimension_numbers = #tpu.dot_dimension_numbers<[1], [0], [0], [1], [0, 0, 1, 1], [], []>} : vector<32x16xf32>, vector<16x32xf32>, vector<32x32xf32> -> vector<32x32xf32>
    %108 = arith.addf %65, %107 : vector<32x32xf32>
    %109 = vector.broadcast %15 : vector<1x32xf32> to vector<32x32xf32>
    %110 = arith.addf %108, %109 : vector<32x32xf32>
    %111 = arith.addf %10, %110 : vector<32x32xf32>
    %cst_45 = arith.constant dense<0.000000e+00> : vector<32xf32>
    %112 = vector.multi_reduction <add>, %111, %cst_45 [1] : vector<32x32xf32> to vector<32xf32>
    %113 = vector.shape_cast %112 : vector<32xf32> to vector<32x1xf32>
    %cst_46 = arith.constant 3.200000e+01 : f32
    %114 = vector.broadcast %cst_46 : f32 to vector<32x1xf32>
    %115 = arith.divf %113, %114 : vector<32x1xf32>
    %116 = vector.broadcast %115 : vector<32x1xf32> to vector<32x32xf32>
    %117 = arith.subf %111, %116 : vector<32x32xf32>
    %118 = arith.mulf %117, %117 : vector<32x32xf32>
    %cst_47 = arith.constant dense<0.000000e+00> : vector<32xf32>
    %119 = vector.multi_reduction <add>, %118, %cst_47 [1] : vector<32x32xf32> to vector<32xf32>
    %120 = vector.shape_cast %119 : vector<32xf32> to vector<32x1xf32>
    %cst_48 = arith.constant 3.200000e+01 : f32
    %121 = vector.broadcast %cst_48 : f32 to vector<32x1xf32>
    %122 = arith.divf %120, %121 : vector<32x1xf32>
    %123 = vector.broadcast %115 : vector<32x1xf32> to vector<32x32xf32>
    %124 = arith.subf %111, %123 : vector<32x32xf32>
    %cst_49 = arith.constant 9.99999996E-13 : f32
    %125 = vector.broadcast %cst_49 : f32 to vector<32x1xf32>
    %126 = arith.addf %122, %125 : vector<32x1xf32>
    %127 = math.rsqrt %126 : vector<32x1xf32>
    %128 = vector.broadcast %127 : vector<32x1xf32> to vector<32x32xf32>
    %129 = arith.mulf %124, %128 : vector<32x32xf32>
    %130 = vector.broadcast %16 : vector<1x32xf32> to vector<32x32xf32>
    %131 = arith.mulf %129, %130 : vector<32x32xf32>
    %132 = vector.broadcast %17 : vector<1x32xf32> to vector<32x32xf32>
    %133 = arith.addf %131, %132 : vector<32x32xf32>
    %cst_50 = arith.constant dense<0.000000e+00> : vector<32x64xf32>
    %134 = tpu.matmul %133, %5, %cst_50 {dimension_numbers = #tpu.dot_dimension_numbers<[1], [0], [0], [1], [0, 0, 1, 1], [], []>} : vector<32x32xf32>, vector<32x64xf32>, vector<32x64xf32> -> vector<32x64xf32>
    %135 = vector.broadcast %6 : vector<1x64xf32> to vector<32x64xf32>
    %136 = arith.addf %134, %135 : vector<32x64xf32>
    %137 = arith.mulf %136, %136 : vector<32x64xf32>
    %138 = arith.mulf %136, %137 : vector<32x64xf32>
    %cst_51 = arith.constant 4.471500e-02 : f32
    %139 = vector.broadcast %cst_51 : f32 to vector<32x64xf32>
    %140 = arith.mulf %139, %138 : vector<32x64xf32>
    %141 = arith.addf %136, %140 : vector<32x64xf32>
    %cst_52 = arith.constant 0.797884583 : f32
    %142 = vector.broadcast %cst_52 : f32 to vector<32x64xf32>
    %143 = arith.mulf %142, %141 : vector<32x64xf32>
    %144 = math.tanh %143 : vector<32x64xf32>
    %cst_53 = arith.constant 1.000000e+00 : f32
    %145 = vector.broadcast %cst_53 : f32 to vector<32x64xf32>
    %146 = arith.addf %145, %144 : vector<32x64xf32>
    %cst_54 = arith.constant 5.000000e-01 : f32
    %147 = vector.broadcast %cst_54 : f32 to vector<32x64xf32>
    %148 = arith.mulf %147, %146 : vector<32x64xf32>
    %149 = arith.mulf %136, %148 : vector<32x64xf32>
    %cst_55 = arith.constant dense<0.000000e+00> : vector<32x32xf32>
    %150 = tpu.matmul %149, %7, %cst_55 {dimension_numbers = #tpu.dot_dimension_numbers<[1], [0], [0], [1], [0, 0, 1, 1], [], []>} : vector<32x64xf32>, vector<64x32xf32>, vector<32x32xf32> -> vector<32x32xf32>
    %151 = vector.broadcast %18 : vector<1x32xf32> to vector<32x32xf32>
    %152 = arith.addf %150, %151 : vector<32x32xf32>
    %153 = arith.addf %133, %152 : vector<32x32xf32>
    %cst_56 = arith.constant dense<0.000000e+00> : vector<32xf32>
    %154 = vector.multi_reduction <add>, %153, %cst_56 [1] : vector<32x32xf32> to vector<32xf32>
    %155 = vector.shape_cast %154 : vector<32xf32> to vector<32x1xf32>
    %cst_57 = arith.constant 3.200000e+01 : f32
    %156 = vector.broadcast %cst_57 : f32 to vector<32x1xf32>
    %157 = arith.divf %155, %156 : vector<32x1xf32>
    %158 = vector.broadcast %157 : vector<32x1xf32> to vector<32x32xf32>
    %159 = arith.subf %153, %158 : vector<32x32xf32>
    %160 = arith.mulf %159, %159 : vector<32x32xf32>
    %cst_58 = arith.constant dense<0.000000e+00> : vector<32xf32>
    %161 = vector.multi_reduction <add>, %160, %cst_58 [1] : vector<32x32xf32> to vector<32xf32>
    %162 = vector.shape_cast %161 : vector<32xf32> to vector<32x1xf32>
    %cst_59 = arith.constant 3.200000e+01 : f32
    %163 = vector.broadcast %cst_59 : f32 to vector<32x1xf32>
    %164 = arith.divf %162, %163 : vector<32x1xf32>
    %165 = vector.broadcast %157 : vector<32x1xf32> to vector<32x32xf32>
    %166 = arith.subf %153, %165 : vector<32x32xf32>
    %cst_60 = arith.constant 9.99999996E-13 : f32
    %167 = vector.broadcast %cst_60 : f32 to vector<32x1xf32>
    %168 = arith.addf %164, %167 : vector<32x1xf32>
    %169 = math.rsqrt %168 : vector<32x1xf32>
    %170 = vector.broadcast %169 : vector<32x1xf32> to vector<32x32xf32>
    %171 = arith.mulf %166, %170 : vector<32x32xf32>
    %172 = vector.broadcast %19 : vector<1x32xf32> to vector<32x32xf32>
    %173 = arith.mulf %171, %172 : vector<32x32xf32>
    %174 = vector.broadcast %20 : vector<1x32xf32> to vector<32x32xf32>
    %175 = arith.addf %173, %174 : vector<32x32xf32>
    %176 = vector.shape_cast %175 : vector<32x32xf32> to vector<4x8x32xf32>
    %177 = vector.extract_strided_slice %176 {offsets = [0, 0, 0], sizes = [4, 1, 32], strides = [1, 1, 1]} : vector<4x8x32xf32> to vector<4x1x32xf32>
    %178 = vector.shape_cast %177 : vector<4x1x32xf32> to vector<4x32xf32>
    %cst_61 = arith.constant dense<0.000000e+00> : vector<4x32xf32>
    %179 = tpu.matmul %178, %8, %cst_61 {dimension_numbers = #tpu.dot_dimension_numbers<[1], [0], [0], [1], [0, 0, 1, 1], [], []>} : vector<4x32xf32>, vector<32x32xf32>, vector<4x32xf32> -> vector<4x32xf32>
    %180 = vector.broadcast %21 : vector<1x32xf32> to vector<4x32xf32>
    %181 = arith.addf %179, %180 : vector<4x32xf32>
    %182 = math.tanh %181 : vector<4x32xf32>
    %183 = vector.shape_cast %182 : vector<4x32xf32> to vector<4x1x32xf32>
    %c0_62 = arith.constant 0 : index
    %c0_63 = arith.constant 0 : index
    %c0_64 = arith.constant 0 : index
    %184 = vector.load %arg11[%c0_62, %c0_63, %c0_64] : memref<4x1x32xf32, #tpu.memory_space<vmem>>, vector<4x1x32xf32>
    tpu.vector_store %arg11[%c0_62, %c0_63, %c0_64], %183 {strides = array<i32>} : memref<4x1x32xf32, #tpu.memory_space<vmem>>, vector<4x1x32xf32>,
    return
  }
  func.func @transform_0(%arg0: i32) -> (i32, i32, i32) {
    %c0_i32 = arith.constant 0 : i32
    %c0_i32_0 = arith.constant 0 : i32
    %c0_i32_1 = arith.constant 0 : i32
    return %arg0, %c0_i32, %c0_i32_0 : i32, i32, i32
  }
  func.func @transform_1(%arg0: i32) -> (i32, i32, i32) {
    %c0_i32 = arith.constant 0 : i32
    %c0_i32_0 = arith.constant 0 : i32
    %c0_i32_1 = arith.constant 0 : i32
    return %arg0, %c0_i32, %c0_i32_0 : i32, i32, i32
  }
  func.func @transform_2(%arg0: i32) -> (i32, i32, i32) {
    %c0_i32 = arith.constant 0 : i32
    %c0_i32_0 = arith.constant 0 : i32
    %c0_i32_1 = arith.constant 0 : i32
    %c0_i32_2 = arith.constant 0 : i32
    return %c0_i32, %c0_i32_0, %c0_i32_1 : i32, i32, i32
  }
  func.func @transform_3(%arg0: i32) -> (i32, i32) {
    %c0_i32 = arith.constant 0 : i32
    %c0_i32_0 = arith.constant 0 : i32
    %c0_i32_1 = arith.constant 0 : i32
    return %c0_i32, %c0_i32_0 : i32, i32
  }
  func.func @transform_4(%arg0: i32) -> (i32, i32, i32) {
    %c0_i32 = arith.constant 0 : i32
    %c0_i32_0 = arith.constant 0 : i32
    %c0_i32_1 = arith.constant 0 : i32
    %c0_i32_2 = arith.constant 0 : i32
    return %c0_i32, %c0_i32_0, %c0_i32_1 : i32, i32, i32
  }
  func.func @transform_5(%arg0: i32) -> (i32, i32) {
    %c0_i32 = arith.constant 0 : i32
    %c0_i32_0 = arith.constant 0 : i32
    %c0_i32_1 = arith.constant 0 : i32
    return %c0_i32, %c0_i32_0 : i32, i32
  }
  func.func @transform_6(%arg0: i32) -> (i32, i32) {
    %c0_i32 = arith.constant 0 : i32
    %c0_i32_0 = arith.constant 0 : i32
    %c0_i32_1 = arith.constant 0 : i32
    return %c0_i32, %c0_i32_0 : i32, i32
  }
  func.func @transform_7(%arg0: i32) -> (i32, i32) {
    %c0_i32 = arith.constant 0 : i32
    %c0_i32_0 = arith.constant 0 : i32
    %c0_i32_1 = arith.constant 0 : i32
    return %c0_i32, %c0_i32_0 : i32, i32
  }
  func.func @transform_8(%arg0: i32) -> (i32, i32) {
    %c0_i32 = arith.constant 0 : i32
    %c0_i32_0 = arith.constant 0 : i32
    %c0_i32_1 = arith.constant 0 : i32
    return %c0_i32, %c0_i32_0 : i32, i32
  }
  func.func @transform_9(%arg0: i32) -> (i32, i32) {
    %c0_i32 = arith.constant 0 : i32
    %c0_i32_0 = arith.constant 0 : i32
    %c0_i32_1 = arith.constant 0 : i32
    return %c0_i32, %c0_i32_0 : i32, i32
  }
  func.func @transform_10(%arg0: i32) -> (i32, i32, i32) {
    %c0_i32 = arith.constant 0 : i32
    %c0_i32_0 = arith.constant 0 : i32
    %c0_i32_1 = arith.constant 0 : i32
    return %arg0, %c0_i32, %c0_i32_0 : i32, i32, i32
  }
}

</mosaic_0001>

<llo_original>
// kernel: _forward_flat_jit.1
$region0: #{_forward_flat_jit.1}
  #allocation0 [shape = 'u32[]', space=smem, size = 0x4, offset = 0x4, fixed_abs, tag = 'smem constant byte address 0x4 - core index']
  #allocation1 [shape = 'u32[72,128]{1,0:T(1,128)}', space=vmem, size = 0x9000, scoped, tag = 'internal scratch']
  %s0 = inlined_call_operand.vmem [shape: f32[8,8,32], index: 0, kind: input, shape index: {}]
  %s1 = inlined_call_operand.vmem [shape: f32[8,1,8], index: 1, kind: input, shape index: {}]
  %s2 = inlined_call_operand.vmem [shape: f32[6,32,16], index: 2, kind: input, shape index: {}]
  %s3 = inlined_call_operand.vmem [shape: f32[6,16], index: 3, kind: input, shape index: {}]
  %s4 = inlined_call_operand.vmem [shape: f32[2,16,32], index: 4, kind: input, shape index: {}]
  %s5 = inlined_call_operand.vmem [shape: f32[32,64], index: 5, kind: input, shape index: {}]
  %s6 = inlined_call_operand.vmem [shape: f32[1,64], index: 6, kind: input, shape index: {}]
  %s7 = inlined_call_operand.vmem [shape: f32[64,32], index: 7, kind: input, shape index: {}]
  %s8 = inlined_call_operand.vmem [shape: f32[32,32], index: 8, kind: input, shape index: {}]
  %s9 = inlined_call_operand.vmem [shape: f32[8,32], index: 9, kind: input, shape index: {}]
  %s10 = inlined_call_operand.vmem [shape: f32[8,1,32], index: 10, kind: output, shape index: {}]
  %s11 = sld [smem:[#allocation0]]
  $region73: #{_forward_flat_jit.1} parent=0
    _
  %s13 = ssub.s32 1, %s11
  %s14 = scalar_select 0, %s13, %s11
  loop: start=0, step=1, limit=4
  $region2: #{_forward_flat_jit.1} parent=0 // loop_pre_header
    _
  $region3: #{_forward_flat_jit.1} parent=0 // loop_header
    %s16 = sphi 0, %s20
    %p17 = scmp.ge.s32.totalorder %s16, 4
    %s26 = sphi 0, %s28
    %s29 = sphi 0, %s26
    %s30 = sphi 0, %s29
    %s46 = sphi 0, %s30
    %s52 = sphi 0, %s54
    %s55 = sphi 0, %s52
    %s56 = sphi 0, %s55
    %s72 = sphi 0, %s56
    %s76 = sphi 0, %s76
    %s78 = sphi 0, %s76
    %s79 = sphi 0, %s78
    %s93 = sphi 0, %s79
    %s97 = sphi 0, %s97
    %s99 = sphi 0, %s97
    %s100 = sphi 0, %s99
    %s114 = sphi 0, %s100
    %s118 = sphi 0, %s118
    %s120 = sphi 0, %s118
    %s121 = sphi 0, %s120
    %s135 = sphi 0, %s121
    %s139 = sphi 0, %s139
    %s141 = sphi 0, %s139
    %s142 = sphi 0, %s141
    %s156 = sphi 0, %s142
    %s160 = sphi 0, %s160
    %s162 = sphi 0, %s160
    %s163 = sphi 0, %s162
    %s177 = sphi 0, %s163
    %s181 = sphi 0, %s181
    %s183 = sphi 0, %s181
    %s184 = sphi 0, %s183
    %s198 = sphi 0, %s184
    %s202 = sphi 0, %s202
    %s204 = sphi 0, %s202
    %s205 = sphi 0, %s204
    %s219 = sphi 0, %s205
    %s223 = sphi 0, %s223
    %s225 = sphi 0, %s223
    %s226 = sphi 0, %s225
    %s240 = sphi 0, %s226
    %s246 = sphi 0, %s248
    %s249 = sphi 0, %s246
    %s250 = sphi 0, %s249
    %s266 = sphi 0, %s250
  $region4: #{_forward_flat_jit.1} parent=0 // loop_header_branch
    %19 = sbr.rel (%p17) target = $region8
  $region5: #{_forward_flat_jit.1} parent=0 // loop_body
    %s21 = ssub.s32 %s16, 1
    %s22 = ssub.s32 %s16, 2
    %s23 = sadd.s32 %s16, 1
    %s24 = ssub.s32 %s16, %s23
    %p25 = scmp.eq.s32.totalorder %s24, 0
    %s27 = sadd.s32 %s26, 1
    %s28 = scalar_select %p25, %s26, %s27
    %p31 = pneg %p25
    %p32 = scmp.eq.s32.totalorder %s16, 1
    %p33 = por %p31, %p32
    %p34 = scmp.ne.s32.totalorder %s26, %s29
    %p35 = scmp.eq.s32.totalorder %s16, 0
    %p36 = por %p34, %p35
    %p37 = scmp.ne.s32.totalorder %s26, %s29
    %p38 = scmp.eq.s32.totalorder %s21, 1
    %p39 = por %p37, %p38
    %p40 = scmp.ne.s32.totalorder %s29, %s30
    %p41 = scmp.eq.s32.totalorder %s21, 0
    %p42 = por %p40, %p41
    %p43 = scmp.ne.s32.totalorder %s29, %s30
    %p44 = scmp.eq.s32.totalorder %s22, 1
    %p45 = por %p43, %p44
    %p47 = scmp.ne.s32.totalorder %s30, %s46
    %p48 = scmp.eq.s32.totalorder %s22, 0
    %p49 = por %p47, %p48
    %s50 = ssub.s32 %s16, %s23
    %p51 = scmp.eq.s32.totalorder %s50, 0
    %s53 = sadd.s32 %s52, 1
    %s54 = scalar_select %p51, %s52, %s53
    %p57 = pneg %p51
    %p58 = scmp.eq.s32.totalorder %s16, 1
    %p59 = por %p57, %p58
    %p60 = scmp.ne.s32.totalorder %s52, %s55
    %p61 = scmp.eq.s32.totalorder %s16, 0
    %p62 = por %p60, %p61
    %p63 = scmp.ne.s32.totalorder %s52, %s55
    %p64 = scmp.eq.s32.totalorder %s21, 1
    %p65 = por %p63, %p64
    %p66 = scmp.ne.s32.totalorder %s55, %s56
    %p67 = scmp.eq.s32.totalorder %s21, 0
    %p68 = por %p66, %p67
    %p69 = scmp.ne.s32.totalorder %s55, %s56
    %p70 = scmp.eq.s32.totalorder %s22, 1
    %p71 = por %p69, %p70
    %p73 = scmp.ne.s32.totalorder %s56, %s72
    %p74 = scmp.eq.s32.totalorder %s22, 0
    %p75 = por %p73, %p74
    %s77 = sadd.s32 %s76, 1
    %p80 = scmp.eq.s32.totalorder %s16, 1
    %p81 = scmp.ne.s32.totalorder %s76, %s78
    %p82 = scmp.eq.s32.totalorder %s16, 0
    %p83 = por %p81, %p82
    %p84 = scmp.ne.s32.totalorder %s76, %s78
    %p85 = scmp.eq.s32.totalorder %s21, 1
    %p86 = por %p84, %p85
    %p87 = scmp.ne.s32.totalorder %s78, %s79
    %p88 = scmp.eq.s32.totalorder %s21, 0
    %p89 = por %p87, %p88
    %p90 = scmp.ne.s32.totalorder %s78, %s79
    %p91 = scmp.eq.s32.totalorder %s22, 1
    %p92 = por %p90, %p91
    %p94 = scmp.ne.s32.totalorder %s79, %s93
    %p95 = scmp.eq.s32.totalorder %s22, 0
    %p96 = por %p94, %p95
    %s98 = sadd.s32 %s97, 1
    %p101 = scmp.eq.s32.totalorder %s16, 1
    %p102 = scmp.ne.s32.totalorder %s97, %s99
    %p103 = scmp.eq.s32.totalorder %s16, 0
    %p104 = por %p102, %p103
    %p105 = scmp.ne.s32.totalorder %s97, %s99
    %p106 = scmp.eq.s32.totalorder %s21, 1
    %p107 = por %p105, %p106
    %p108 = scmp.ne.s32.totalorder %s99, %s100
    %p109 = scmp.eq.s32.totalorder %s21, 0
    %p110 = por %p108, %p109
    %p111 = scmp.ne.s32.totalorder %s99, %s100
    %p112 = scmp.eq.s32.totalorder %s22, 1
    %p113 = por %p111, %p112
    %p115 = scmp.ne.s32.totalorder %s100, %s114
    %p116 = scmp.eq.s32.totalorder %s22, 0
    %p117 = por %p115, %p116
    %s119 = sadd.s32 %s118, 1
    %p122 = scmp.eq.s32.totalorder %s16, 1
    %p123 = scmp.ne.s32.totalorder %s118, %s120
    %p124 = scmp.eq.s32.totalorder %s16, 0
    %p125 = por %p123, %p124
    %p126 = scmp.ne.s32.totalorder %s118, %s120
    %p127 = scmp.eq.s32.totalorder %s21, 1
    %p128 = por %p126, %p127
    %p129 = scmp.ne.s32.totalorder %s120, %s121
    %p130 = scmp.eq.s32.totalorder %s21, 0
    %p131 = por %p129, %p130
    %p132 = scmp.ne.s32.totalorder %s120, %s121
    %p133 = scmp.eq.s32.totalorder %s22, 1
    %p134 = por %p132, %p133
    %p136 = scmp.ne.s32.totalorder %s121, %s135
    %p137 = scmp.eq.s32.totalorder %s22, 0
    %p138 = por %p136, %p137
    %s140 = sadd.s32 %s139, 1
    %p143 = scmp.eq.s32.totalorder %s16, 1
    %p144 = scmp.ne.s32.totalorder %s139, %s141
    %p145 = scmp.eq.s32.totalorder %s16, 0
    %p146 = por %p144, %p145
    %p147 = scmp.ne.s32.totalorder %s139, %s141
    %p148 = scmp.eq.s32.totalorder %s21, 1
    %p149 = por %p147, %p148
    %p150 = scmp.ne.s32.totalorder %s141, %s142
    %p151 = scmp.eq.s32.totalorder %s21, 0
    %p152 = por %p150, %p151
    %p153 = scmp.ne.s32.totalorder %s141, %s142
    %p154 = scmp.eq.s32.totalorder %s22, 1
    %p155 = por %p153, %p154
    %p157 = scmp.ne.s32.totalorder %s142, %s156
    %p158 = scmp.eq.s32.totalorder %s22, 0
    %p159 = por %p157, %p158
    %s161 = sadd.s32 %s160, 1
    %p164 = scmp.eq.s32.totalorder %s16, 1
    %p165 = scmp.ne.s32.totalorder %s160, %s162
    %p166 = scmp.eq.s32.totalorder %s16, 0
    %p167 = por %p165, %p166
    %p168 = scmp.ne.s32.totalorder %s160, %s162
    %p169 = scmp.eq.s32.totalorder %s21, 1
    %p170 = por %p168, %p169
    %p171 = scmp.ne.s32.totalorder %s162, %s163
    %p172 = scmp.eq.s32.totalorder %s21, 0
    %p173 = por %p171, %p172
    %p174 = scmp.ne.s32.totalorder %s162, %s163
    %p175 = scmp.eq.s32.totalorder %s22, 1
    %p176 = por %p174, %p175
    %p178 = scmp.ne.s32.totalorder %s163, %s177
    %p179 = scmp.eq.s32.totalorder %s22, 0
    %p180 = por %p178, %p179
    %s182 = sadd.s32 %s181, 1
    %p185 = scmp.eq.s32.totalorder %s16, 1
    %p186 = scmp.ne.s32.totalorder %s181, %s183
    %p187 = scmp.eq.s32.totalorder %s16, 0
    %p188 = por %p186, %p187
    %p189 = scmp.ne.s32.totalorder %s181, %s183
    %p190 = scmp.eq.s32.totalorder %s21, 1
    %p191 = por %p189, %p190
    %p192 = scmp.ne.s32.totalorder %s183, %s184
    %p193 = scmp.eq.s32.totalorder %s21, 0
    %p194 = por %p192, %p193
    %p195 = scmp.ne.s32.totalorder %s183, %s184
    %p196 = scmp.eq.s32.totalorder %s22, 1
    %p197 = por %p195, %p196
    %p199 = scmp.ne.s32.totalorder %s184, %s198
    %p200 = scmp.eq.s32.totalorder %s22, 0
    %p201 = por %p199, %p200
    %s203 = sadd.s32 %s202, 1
    %p206 = scmp.eq.s32.totalorder %s16, 1
    %p207 = scmp.ne.s32.totalorder %s202, %s204
    %p208 = scmp.eq.s32.totalorder %s16, 0
    %p209 = por %p207, %p208
    %p210 = scmp.ne.s32.totalorder %s202, %s204
    %p211 = scmp.eq.s32.totalorder %s21, 1
    %p212 = por %p210, %p211
    %p213 = scmp.ne.s32.totalorder %s204, %s205
    %p214 = scmp.eq.s32.totalorder %s21, 0
    %p215 = por %p213, %p214
    %p216 = scmp.ne.s32.totalorder %s204, %s205
    %p217 = scmp.eq.s32.totalorder %s22, 1
    %p218 = por %p216, %p217
    %p220 = scmp.ne.s32.totalorder %s205, %s219
    %p221 = scmp.eq.s32.totalorder %s22, 0
    %p222 = por %p220, %p221
    %s224 = sadd.s32 %s223, 1
    %p227 = scmp.eq.s32.totalorder %s16, 1
    %p228 = scmp.ne.s32.totalorder %s223, %s225
    %p229 = scmp.eq.s32.totalorder %s16, 0
    %p230 = por %p228, %p229
    %p231 = scmp.ne.s32.totalorder %s223, %s225
    %p232 = scmp.eq.s32.totalorder %s21, 1
    %p233 = por %p231, %p232
    %p234 = scmp.ne.s32.totalorder %s225, %s226
    %p235 = scmp.eq.s32.totalorder %s21, 0
    %p236 = por %p234, %p235
    %p237 = scmp.ne.s32.totalorder %s225, %s226
    %p238 = scmp.eq.s32.totalorder %s22, 1
    %p239 = por %p237, %p238
    %p241 = scmp.ne.s32.totalorder %s226, %s240
    %p242 = scmp.eq.s32.totalorder %s22, 0
    %p243 = por %p241, %p242
    %s244 = ssub.s32 %s16, %s23
    %p245 = scmp.eq.s32.totalorder %s244, 0
    %s247 = sadd.s32 %s246, 1
    %s248 = scalar_select %p245, %s246, %s247
    %p251 = pneg %p245
    %p252 = scmp.eq.s32.totalorder %s16, 1
    %p253 = por %p251, %p252
    %p254 = scmp.ne.s32.totalorder %s246, %s249
    %p255 = scmp.eq.s32.totalorder %s16, 0
    %p256 = por %p254, %p255
    %p257 = scmp.ne.s32.totalorder %s246, %s249
    %p258 = scmp.eq.s32.totalorder %s21, 1
    %p259 = por %p257, %p258
    %p260 = scmp.ne.s32.totalorder %s249, %s250
    %p261 = scmp.eq.s32.totalorder %s21, 0
    %p262 = por %p260, %p261
    %p263 = scmp.ne.s32.totalorder %s249, %s250
    %p264 = scmp.eq.s32.totalorder %s22, 1
    %p265 = por %p263, %p264
    %p267 = scmp.ne.s32.totalorder %s250, %s266
    %p268 = scmp.eq.s32.totalorder %s22, 0
    %p269 = por %p267, %p268
    %p270 = scmp.le.s32.totalorder 1, %s16
    %p271 = scmp.lt.s32.totalorder %s16, 3
    %p272 = pnand %p270, %p271
    %p273 = pneg %p272
    // Predicated region
    $region9: #{_forward_flat_jit.1} parent=5 // pred_check
      _
    $region10: #{_forward_flat_jit.1} parent=5 // pred_check_branch
      %275 = sbr.rel (%p272) target = $region12
    $region11: #{_forward_flat_jit.1} parent=5 // pred_region
      %s276 = ssub.s32 %s16, 1
      // Predicated region
      $region13: #{_forward_flat_jit.1} parent=11 // pred_check
        %p277 = pneg %p89
      $region14: #{_forward_flat_jit.1} parent=11 // pred_check_branch
        %279 = sbr.rel (%p277) target = $region16
      $region15: #{_forward_flat_jit.1} parent=11 // pred_region
        _
      $region16: #{_forward_flat_jit.1} parent=11 // pred_fallthru
        _
      // Predicated region
      $region17: #{_forward_flat_jit.1} parent=11 // pred_check
        %p280 = pneg %p110
      $region18: #{_forward_flat_jit.1} parent=11 // pred_check_branch
        %282 = sbr.rel (%p280) target = $region20
      $region19: #{_forward_flat_jit.1} parent=11 // pred_region
        _
      $region20: #{_forward_flat_jit.1} parent=11 // pred_fallthru
        _
      // Predicated region
      $region21: #{_forward_flat_jit.1} parent=11 // pred_check
        %p283 = pneg %p131
      $region22: #{_forward_flat_jit.1} parent=11 // pred_check_branch
        %285 = sbr.rel (%p283) target = $region24
      $region23: #{_forward_flat_jit.1} parent=11 // pred_region
        _
      $region24: #{_forward_flat_jit.1} parent=11 // pred_fallthru
        _
      // Predicated region
      $region25: #{_forward_flat_jit.1} parent=11 // pred_check
        %p286 = pneg %p152
      $region26: #{_forward_flat_jit.1} parent=11 // pred_check_branch
        %288 = sbr.rel (%p286) target = $region28
      $region27: #{_forward_flat_jit.1} parent=11 // pred_region
        _
      $region28: #{_forward_flat_jit.1} parent=11 // pred_fallthru
        _
      // Predicated region
      $region29: #{_forward_flat_jit.1} parent=11 // pred_check
        %p289 = pneg %p173
      $region30: #{_forward_flat_jit.1} parent=11 // pred_check_branch
        %291 = sbr.rel (%p289) target = $region32
      $region31: #{_forward_flat_jit.1} parent=11 // pred_region
        _
      $region32: #{_forward_flat_jit.1} parent=11 // pred_fallthru
        _
      // Predicated region
      $region33: #{_forward_flat_jit.1} parent=11 // pred_check
        %p292 = pneg %p194
      $region34: #{_forward_flat_jit.1} parent=11 // pred_check_branch
        %294 = sbr.rel (%p292) target = $region36
      $region35: #{_forward_flat_jit.1} parent=11 // pred_region
        _
      $region36: #{_forward_flat_jit.1} parent=11 // pred_fallthru
        _
      // Predicated region
      $region37: #{_forward_flat_jit.1} parent=11 // pred_check
        %p295 = pneg %p215
      $region38: #{_forward_flat_jit.1} parent=11 // pred_check_branch
        %297 = sbr.rel (%p295) target = $region40
      $region39: #{_forward_flat_jit.1} parent=11 // pred_region
        _
      $region40: #{_forward_flat_jit.1} parent=11 // pred_fallthru
        _
      // Predicated region
      $region41: #{_forward_flat_jit.1} parent=11 // pred_check
        %p298 = pneg %p236
      $region42: #{_forward_flat_jit.1} parent=11 // pred_check_branch
        %300 = sbr.rel (%p298) target = $region44
      $region43: #{_forward_flat_jit.1} parent=11 // pred_region
        _
      $region44: #{_forward_flat_jit.1} parent=11 // pred_fallthru
        _
    $region12: #{_forward_flat_jit.1} parent=5 // pred_fallthru
      _
    %p301 = scmp.lt.s32.totalorder %s16, 2
    // Predicated region
    $region45: #{_forward_flat_jit.1} parent=5 // pred_check
      %p302 = pneg %p301
    $region46: #{_forward_flat_jit.1} parent=5 // pred_check_branch
      %304 = sbr.rel (%p302) target = $region48
    $region47: #{_forward_flat_jit.1} parent=5 // pred_region
      // Predicated region
      $region49: #{_forward_flat_jit.1} parent=47 // pred_check
        %p305 = pneg %p36
      $region50: #{_forward_flat_jit.1} parent=47 // pred_check_branch
        %307 = sbr.rel (%p305) target = $region52
      $region51: #{_forward_flat_jit.1} parent=47 // pred_region
        %s308 = smul.u32 4, %s16
        %p309 = scmp.lt.s32.totalorder %s308, 7
        %s310 = scalar_select %p309, %s308, 7
        %s311 = smul.addr %s310, 8
        %s312 = scalar_lea.vmem %s0, %s311
        %s313 = smul.u32 4, %s16
      $region52: #{_forward_flat_jit.1} parent=47 // pred_fallthru
        _
      // Predicated region
      $region53: #{_forward_flat_jit.1} parent=47 // pred_check
        %p314 = pneg %p62
      $region54: #{_forward_flat_jit.1} parent=47 // pred_check_branch
        %316 = sbr.rel (%p314) target = $region56
      $region55: #{_forward_flat_jit.1} parent=47 // pred_region
        %s317 = smul.u32 4, %s16
        %p318 = scmp.lt.s32.totalorder %s317, 7
        %s319 = scalar_select %p318, %s317, 7
        %s320 = scalar_lea.vmem %s1, %s319
        %s321 = smul.u32 4, %s16
      $region56: #{_forward_flat_jit.1} parent=47 // pred_fallthru
        _
    $region48: #{_forward_flat_jit.1} parent=5 // pred_fallthru
      _
    %p322 = scmp.le.s32.totalorder 1, %s16
    %p323 = scmp.lt.s32.totalorder %s16, 3
    %p324 = pnand %p322, %p323
    %p325 = pneg %p324
    // Predicated region
    $region57: #{_forward_flat_jit.1} parent=5 // pred_check
      _
    $region58: #{_forward_flat_jit.1} parent=5 // pred_check_branch
      %327 = sbr.rel (%p324) target = $region60
    $region59: #{_forward_flat_jit.1} parent=5 // pred_region
      %s328 = ssub.s32 %s16, 1
      %s329 = smul.u32 4, %s21
      %p330 = scmp.lt.s32.totalorder %s329, 7
      %s331 = scalar_select %p330, %s329, 7
      %s332 = smul.addr %s331, 8
      %s333 = scalar_lea.vmem %s0, %s332
      %p334 = pneg %p42
      %p335 = pneg %p39
      %s336 = smul.u32 4, %s21
      %p337 = scmp.lt.s32.totalorder %s336, 7
      %s338 = scalar_select %p337, %s336, 7
      %s339 = scalar_lea.vmem %s1, %s338
      %p340 = pneg %p68
      %p341 = pneg %p65
      %p342 = pneg %p89
      %p343 = pneg %p86
      %p344 = pneg %p110
      %p345 = pneg %p107
      %p346 = pneg %p131
      %p347 = pneg %p128
      %p348 = pneg %p152
      %p349 = pneg %p149
      %p350 = pneg %p173
      %p351 = pneg %p170
      %p352 = pneg %p194
      %p353 = pneg %p191
      %p354 = pneg %p215
      %p355 = pneg %p212
      %p356 = pneg %p236
      %p357 = pneg %p233
      %p358 = pneg %p262
      %p359 = pneg %p259
      %s360 = smul.u32 4, %s21
      %p361 = scmp.lt.s32.totalorder %s360, 7
      %s362 = scalar_select %p361, %s360, 7
      %s363 = scalar_lea.vmem %s10, %s362
      %s364 = smul.u32 4, %s21
      %p365 = scmp.lt.s32.totalorder %s364, 7
      %s366 = scalar_select %p365, %s364, 7
      %s367 = smul.addr %s366, 8
      %s368 = scalar_lea.vmem %s0, %s367
      %s369 = smul.u32 4, %s21
      %s370 = smul.u32 4, %s21
      %p371 = scmp.lt.s32.totalorder %s370, 7
      %s372 = scalar_select %p371, %s370, 7
      %s373 = scalar_lea.vmem %s1, %s372
      %s374 = smul.u32 4, %s21
      %s375 = smul.u32 4, %s21
      %p376 = scmp.lt.s32.totalorder %s375, 7
      %s377 = scalar_select %p376, %s375, 7
      %s378 = scalar_lea.vmem %s10, %s377
      %s379 = smul.u32 4, %s21
      %v380 = vld [vmem:[%s368] sm:$0xff]
      %v381 = vld [vmem:[%s368 + $0x8] sm:$0xff]
      %v382 = vld [vmem:[%s368 + $0x10] sm:$0xff]
      %v383 = vld [vmem:[%s368 + $0x18] sm:$0xff]
      %v384 = vld [vmem:[%s373] sm:$0x1]
      %v385 = vld [vmem:[%s373 + $0x1] sm:$0x1]
      %v386 = vld [vmem:[%s373 + $0x2] sm:$0x1]
      %v387 = vld [vmem:[%s373 + $0x3] sm:$0x1]
      %v388 = vld [vmem:[%s2] sm:$0xff]
      %v389 = vld [vmem:[%s2 + $0x8] sm:$0xff]
      %v390 = vld [vmem:[%s2 + $0x10] sm:$0xff]
      %v391 = vld [vmem:[%s2 + $0x18] sm:$0xff]
      %v392 = vld [vmem:[%s2 + $0x20] sm:$0xff]
      %v393 = vld [vmem:[%s2 + $0x28] sm:$0xff]
      %v394 = vld [vmem:[%s2 + $0x30] sm:$0xff]
      %v395 = vld [vmem:[%s2 + $0x38] sm:$0xff]
      %v396 = vld [vmem:[%s2 + $0x40] sm:$0xff]
      %v397 = vld [vmem:[%s2 + $0x48] sm:$0xff]
      %v398 = vld [vmem:[%s2 + $0x50] sm:$0xff]
      %v399 = vld [vmem:[%s2 + $0x58] sm:$0xff]
      %v400 = vld [vmem:[%s2 + $0x60] sm:$0xff]
      %v401 = vld [vmem:[%s2 + $0x68] sm:$0xff]
      %v402 = vld [vmem:[%s2 + $0x70] sm:$0xff]
      %v403 = vld [vmem:[%s2 + $0x78] sm:$0xff]
      %v404 = vld [vmem:[%s2 + $0x80] sm:$0xff]
      %v405 = vld [vmem:[%s2 + $0x88] sm:$0xff]
      %v406 = vld [vmem:[%s2 + $0x90] sm:$0xff]
      %v407 = vld [vmem:[%s2 + $0x98] sm:$0xff]
      %v408 = vld [vmem:[%s2 + $0xa0] sm:$0xff]
      %v409 = vld [vmem:[%s2 + $0xa8] sm:$0xff]
      %v410 = vld [vmem:[%s2 + $0xb0] sm:$0xff]
      %v411 = vld [vmem:[%s2 + $0xb8] sm:$0xff]
      %v412 = vld [vmem:[%s3] sm:$0x3f]
      %v413 = vld [vmem:[%s4] sm:$0xff]
      %v414 = vld [vmem:[%s4 + $0x8] sm:$0xff]
      %v415 = vld [vmem:[%s4 + $0x10] sm:$0xff]
      %v416 = vld [vmem:[%s4 + $0x18] sm:$0xff]
      %v417 = vld [vmem:[%s5] sm:$0xff]
      %v418 = vld [vmem:[%s5 + $0x8] sm:$0xff]
      %v419 = vld [vmem:[%s5 + $0x10] sm:$0xff]
      %v420 = vld [vmem:[%s5 + $0x18] sm:$0xff]
      %v421 = vld [vmem:[%s6] sm:$0x1]
      %v422 = vld [vmem:[%s7] sm:$0xff]
      %v423 = vld [vmem:[%s7 + $0x8] sm:$0xff]
      %v424 = vld [vmem:[%s7 + $0x10] sm:$0xff]
      %v425 = vld [vmem:[%s7 + $0x18] sm:$0xff]
      %v426 = vld [vmem:[%s7 + $0x20] sm:$0xff]
      %v427 = vld [vmem:[%s7 + $0x28] sm:$0xff]
      %v428 = vld [vmem:[%s7 + $0x30] sm:$0xff]
      %v429 = vld [vmem:[%s7 + $0x38] sm:$0xff]
      %v430 = vld [vmem:[%s8] sm:$0xff]
      %v431 = vld [vmem:[%s8 + $0x8] sm:$0xff]
      %v432 = vld [vmem:[%s8 + $0x10] sm:$0xff]
      %v433 = vld [vmem:[%s8 + $0x18] sm:$0xff]
      %v434 = vld [vmem:[%s9] sm:$0xff]
      %v435 = vsub.f32 1.0, %v384
      %v436 = vsub.f32 1.0, %v385
      %v437 = vsub.f32 1.0, %v386
      %v438 = vsub.f32 1.0, %v387
      %v439 = vmul.f32 %v435, -1e+09
      %v440 = vmul.f32 %v436, -1e+09
      %v441 = vmul.f32 %v437, -1e+09
      %v442 = vmul.f32 %v438, -1e+09
      %v443 = vperm.slane %v412, 0
      %vm444 = vcmask 261120
      %v446 = vsel %vm444, %v380, 0
      %v449 = vsel %vm444, %v381, 0
      %v452 = vsel %vm444, %v382, 0
      %v455 = vsel %vm444, %v383, 0
      %457 = vmatpush.msra.mxu0 0.0
      %458 = vmatpush.msra.mxu0 0.0
      %459 = vmatpush.msra.mxu0 0.0
      %460 = vmatpush.msra.mxu0 0.0
      %461 = vmatpush.msra.mxu0 0.0
      %462 = vmatpush.msra.mxu0 0.0
      %463 = vmatpush.msra.mxu0 0.0
      %464 = vmatpush.msra.mxu0 0.0
      %465 = vmatpush.msra.mxu0 0.0
      %466 = vmatpush.msra.mxu0 0.0
      %467 = vmatpush.msra.mxu0 0.0
      %468 = vmatpush.msra.mxu0 0.0
      %469 = vmatpush.msra.mxu0 %v391
      %470 = vmatpush.msra.mxu0 %v390
      %471 = vmatpush.msra.mxu0 %v389
      %472 = vmatpush.msra.mxu0 %v388
      %473 = vmatmul.f32.gmra.mxu0 %v446
      %v474 = vpop.f32.mrf.mxu0
      %v475 = vadd.f32 %v443, %v474
      %476 = vmatmul.f32.gmra.mxu0 %v449
      %v477 = vpop.f32.mrf.mxu0
      %v478 = vadd.f32 %v443, %v477
      %479 = vmatmul.f32.gmra.mxu0 %v452
      %v480 = vpop.f32.mrf.mxu0
      %v481 = vadd.f32 %v443, %v480
      %482 = vmatmul.f32.gmra.mxu0 %v455
      %v483 = vpop.f32.mrf.mxu0
      %v484 = vadd.f32 %v443, %v483
      %485 = vdwg.mxu0
      %v486 = vperm.slane %v412, 2
      %487 = vmatpush.msra.mxu0 0.0
      %488 = vmatpush.msra.mxu0 0.0
      %489 = vmatpush.msra.mxu0 0.0
      %490 = vmatpush.msra.mxu0 0.0
      %491 = vmatpush.msra.mxu0 0.0
      %492 = vmatpush.msra.mxu0 0.0
      %493 = vmatpush.msra.mxu0 0.0
      %494 = vmatpush.msra.mxu0 0.0
      %495 = vmatpush.msra.mxu0 0.0
      %496 = vmatpush.msra.mxu0 0.0
      %497 = vmatpush.msra.mxu0 0.0
      %498 = vmatpush.msra.mxu0 0.0
      %499 = vmatpush.msra.mxu0 %v399
      %500 = vmatpush.msra.mxu0 %v398
      %501 = vmatpush.msra.mxu0 %v397
      %502 = vmatpush.msra.mxu0 %v396
      %503 = vmatmul.f32.gmra.mxu0 %v446
      %v504 = vpop.f32.mrf.mxu0
      %v505 = vadd.f32 %v486, %v504
      %506 = vmatmul.f32.gmra.mxu0 %v449
      %v507 = vpop.f32.mrf.mxu0
      %v508 = vadd.f32 %v486, %v507
      %509 = vmatmul.f32.gmra.mxu0 %v452
      %v510 = vpop.f32.mrf.mxu0
      %v511 = vadd.f32 %v486, %v510
      %512 = vmatmul.f32.gmra.mxu0 %v455
      %v513 = vpop.f32.mrf.mxu0
      %v514 = vadd.f32 %v486, %v513
      %515 = vdwg.mxu0
      %v516 = vperm.slane %v412, 4
      %517 = vmatpush.msra.mxu0 0.0
      %518 = vmatpush.msra.mxu0 0.0
      %519 = vmatpush.msra.mxu0 0.0
      %520 = vmatpush.msra.mxu0 0.0
      %521 = vmatpush.msra.mxu0 0.0
      %522 = vmatpush.msra.mxu0 0.0
      %523 = vmatpush.msra.mxu0 0.0
      %524 = vmatpush.msra.mxu0 0.0
      %525 = vmatpush.msra.mxu0 0.0
      %526 = vmatpush.msra.mxu0 0.0
      %527 = vmatpush.msra.mxu0 0.0
      %528 = vmatpush.msra.mxu0 0.0
      %529 = vmatpush.msra.mxu0 %v407
      %530 = vmatpush.msra.mxu0 %v406
      %531 = vmatpush.msra.mxu0 %v405
      %532 = vmatpush.msra.mxu0 %v404
      %533 = vmatmul.f32.gmra.mxu0 %v446
      %v534 = vpop.f32.mrf.mxu0
      %v535 = vadd.f32 %v516, %v534
      %536 = vmatmul.f32.gmra.mxu0 %v449
      %v537 = vpop.f32.mrf.mxu0
      %v538 = vadd.f32 %v516, %v537
      %539 = vmatmul.f32.gmra.mxu0 %v452
      %v540 = vpop.f32.mrf.mxu0
      %v541 = vadd.f32 %v516, %v540
      %542 = vmatmul.f32.gmra.mxu0 %v455
      %v543 = vpop.f32.mrf.mxu0
      %v544 = vadd.f32 %v516, %v543
      %545 = vdwg.mxu0
      %vm546 = vcmask 130048
      %v548 = vsel %vm546, %v475, 0
      %v551 = vsel %vm546, %v505, 0
      %553 = vmatpush.xpose.msra.mxu0 0.0
      %554 = vmatpush.xpose.msra.mxu0 0.0
      %555 = vmatpush.xpose.msra.mxu0 0.0
      %556 = vmatpush.xpose.msra.mxu0 0.0
      %557 = vmatpush.xpose.msra.mxu0 0.0
      %558 = vmatpush.xpose.msra.mxu0 0.0
      %559 = vmatpush.xpose.msra.mxu0 0.0
      %560 = vmatpush.xpose.msra.mxu0 0.0
      %561 = vmatpush.xpose.msra.mxu0 0.0
      %562 = vmatpush.xpose.msra.mxu0 0.0
      %563 = vmatpush.xpose.msra.mxu0 0.0
      %564 = vmatpush.xpose.msra.mxu0 0.0
      %565 = vmatpush.xpose.msra.mxu0 0.0
      %566 = vmatpush.xpose.msra.mxu0 0.0
      %567 = vmatpush.xpose.msra.mxu0 0.0
      %568 = vmatpush.xpose.msra.mxu0 %v551
      %569 = vmatmul.f32.gmra.mxu0 %v548
      %v570 = vpop.f32.mrf.mxu0
      %v571 = vadd.f32 0.0, %v570
      %572 = vdwg.mxu0
      %v574 = vsel %vm546, %v478, 0
      %v577 = vsel %vm546, %v508, 0
      %579 = vmatpush.xpose.msra.mxu0 0.0
      %580 = vmatpush.xpose.msra.mxu0 0.0
      %581 = vmatpush.xpose.msra.mxu0 0.0
      %582 = vmatpush.xpose.msra.mxu0 0.0
      %583 = vmatpush.xpose.msra.mxu0 0.0
      %584 = vmatpush.xpose.msra.mxu0 0.0
      %585 = vmatpush.xpose.msra.mxu0 0.0
      %586 = vmatpush.xpose.msra.mxu0 0.0
      %587 = vmatpush.xpose.msra.mxu0 0.0
      %588 = vmatpush.xpose.msra.mxu0 0.0
      %589 = vmatpush.xpose.msra.mxu0 0.0
      %590 = vmatpush.xpose.msra.mxu0 0.0
      %591 = vmatpush.xpose.msra.mxu0 0.0
      %592 = vmatpush.xpose.msra.mxu0 0.0
      %593 = vmatpush.xpose.msra.mxu0 0.0
      %594 = vmatpush.xpose.msra.mxu0 %v577
      %595 = vmatmul.f32.gmra.mxu0 %v574
      %v596 = vpop.f32.mrf.mxu0
      %v597 = vadd.f32 0.0, %v596
      %598 = vdwg.mxu0
      %v600 = vsel %vm546, %v481, 0
      %v603 = vsel %vm546, %v511, 0
      %605 = vmatpush.xpose.msra.mxu0 0.0
      %606 = vmatpush.xpose.msra.mxu0 0.0
      %607 = vmatpush.xpose.msra.mxu0 0.0
      %608 = vmatpush.xpose.msra.mxu0 0.0
      %609 = vmatpush.xpose.msra.mxu0 0.0
      %610 = vmatpush.xpose.msra.mxu0 0.0
      %611 = vmatpush.xpose.msra.mxu0 0.0
      %612 = vmatpush.xpose.msra.mxu0 0.0
      %613 = vmatpush.xpose.msra.mxu0 0.0
      %614 = vmatpush.xpose.msra.mxu0 0.0
      %615 = vmatpush.xpose.msra.mxu0 0.0
      %616 = vmatpush.xpose.msra.mxu0 0.0
      %617 = vmatpush.xpose.msra.mxu0 0.0
      %618 = vmatpush.xpose.msra.mxu0 0.0
      %619 = vmatpush.xpose.msra.mxu0 0.0
      %620 = vmatpush.xpose.msra.mxu0 %v603
      %621 = vmatmul.f32.gmra.mxu0 %v600
      %v622 = vpop.f32.mrf.mxu0
      %v623 = vadd.f32 0.0, %v622
      %624 = vdwg.mxu0
      %v626 = vsel %vm546, %v484, 0
      %v629 = vsel %vm546, %v514, 0
      %631 = vmatpush.xpose.msra.mxu0 0.0
      %632 = vmatpush.xpose.msra.mxu0 0.0
      %633 = vmatpush.xpose.msra.mxu0 0.0
      %634 = vmatpush.xpose.msra.mxu0 0.0
      %635 = vmatpush.xpose.msra.mxu0 0.0
      %636 = vmatpush.xpose.msra.mxu0 0.0
      %637 = vmatpush.xpose.msra.mxu0 0.0
      %638 = vmatpush.xpose.msra.mxu0 0.0
      %639 = vmatpush.xpose.msra.mxu0 0.0
      %640 = vmatpush.xpose.msra.mxu0 0.0
      %641 = vmatpush.xpose.msra.mxu0 0.0
      %642 = vmatpush.xpose.msra.mxu0 0.0
      %643 = vmatpush.xpose.msra.mxu0 0.0
      %644 = vmatpush.xpose.msra.mxu0 0.0
      %645 = vmatpush.xpose.msra.mxu0 0.0
      %646 = vmatpush.xpose.msra.mxu0 %v629
      %647 = vmatmul.f32.gmra.mxu0 %v626
      %v648 = vpop.f32.mrf.mxu0
      %v649 = vadd.f32 0.0, %v648
      %650 = vdwg.mxu0
      %v651 = vmul.f32 %v571, 0.25
      %v652 = vmul.f32 %v597, 0.25
      %v653 = vmul.f32 %v623, 0.25
      %v654 = vmul.f32 %v649, 0.25
      %v659 = vperm.slane %v439, 0
      %v660 = vperm.slane %v440, 0
      %v661 = vperm.slane %v441, 0
      %v662 = vperm.slane %v442, 0
      %v667 = vadd.f32 %v651, %v659
      %v668 = vadd.f32 %v652, %v660
      %v669 = vadd.f32 %v653, %v661
      %v670 = vadd.f32 %v654, %v662
      %vm671 = vcmask 64512
      %v672 = vsel %vm671, %v667, -inf
      %673 = vmax.xlane.f32.xlu0 %v672
      %v674 = vpop.xlane.xlu0 %673
      %v675 = vsel %vm671, %v668, -inf
      %676 = vmax.xlane.f32.xlu0 %v675
      %v677 = vpop.xlane.xlu0 %676
      %v678 = vsel %vm671, %v669, -inf
      %679 = vmax.xlane.f32.xlu0 %v678
      %v680 = vpop.xlane.xlu0 %679
      %v681 = vsel %vm671, %v670, -inf
      %682 = vmax.xlane.f32.xlu0 %v681
      %v683 = vpop.xlane.xlu0 %682
      %v684 = vsub.f32 %v667, %v674
      %v685 = vsub.f32 %v668, %v677
      %v686 = vsub.f32 %v669, %v680
      %v687 = vsub.f32 %v670, %v683
      %v688 = vmul.f32 %v684, 1.442695
      %v689 = vpow.pop %v688
      %v690 = vmul.f32 %v685, 1.442695
      %v691 = vpow.pop %v690
      %v692 = vmul.f32 %v686, 1.442695
      %v693 = vpow.pop %v692
      %v694 = vmul.f32 %v687, 1.442695
      %v695 = vpow.pop %v694
      %v696 = vsel %vm671, %v689, 0.0
      %697 = vadd.xlane.f32.xlu0 %v696
      %v698 = vpop.xlane.xlu0 %697
      %v699 = vsel %vm671, %v691, 0.0
      %700 = vadd.xlane.f32.xlu0 %v699
      %v701 = vpop.xlane.xlu0 %700
      %v702 = vsel %vm671, %v693, 0.0
      %703 = vadd.xlane.f32.xlu0 %v702
      %v704 = vpop.xlane.xlu0 %703
      %v705 = vsel %vm671, %v695, 0.0
      %706 = vadd.xlane.f32.xlu0 %v705
      %v707 = vpop.xlane.xlu0 %706
      %v708 = vrcp.pop %v698
      %v709 = vmul.f32 %v698, %v708
      %v710 = vsub.f32 1.0, %v709
      %v711 = vmul.f32 %v708, %v710
      %v712 = vadd.f32 %v708, %v711
      %vm713 = vweird.f32 %v698
      %vm714 = vweird.f32 %v708
      %vm715 = vmor %vm713, %vm714
      %v716 = vsel %vm715, %v708, %v712
      %v717 = vand.u32 2147483647, %v698
      %vm718 = vcmp.eq.f32.partialorder %v717, 8.507059e+37
      %v719 = vand.u32 %v698, 2147483648
      %v720 = vor.u32 1.1754944e-38, %v719
      %v721 = vsel %vm718, %v720, %v716
      %v722 = vmul.f32 %v689, %v721
      %v723 = vrcp.pop %v701
      %v724 = vmul.f32 %v701, %v723
      %v725 = vsub.f32 1.0, %v724
      %v726 = vmul.f32 %v723, %v725
      %v727 = vadd.f32 %v723, %v726
      %vm728 = vweird.f32 %v701
      %vm729 = vweird.f32 %v723
      %vm730 = vmor %vm728, %vm729
      %v731 = vsel %vm730, %v723, %v727
      %v732 = vand.u32 2147483647, %v701
      %vm733 = vcmp.eq.f32.partialorder %v732, 8.507059e+37
      %v734 = vand.u32 %v701, 2147483648
      %v735 = vor.u32 1.1754944e-38, %v734
      %v736 = vsel %vm733, %v735, %v731
      %v737 = vmul.f32 %v691, %v736
      %v738 = vrcp.pop %v704
      %v739 = vmul.f32 %v704, %v738
      %v740 = vsub.f32 1.0, %v739
      %v741 = vmul.f32 %v738, %v740
      %v742 = vadd.f32 %v738, %v741
      %vm743 = vweird.f32 %v704
      %vm744 = vweird.f32 %v738
      %vm745 = vmor %vm743, %vm744
      %v746 = vsel %vm745, %v738, %v742
      %v747 = vand.u32 2147483647, %v704
      %vm748 = vcmp.eq.f32.partialorder %v747, 8.507059e+37
      %v749 = vand.u32 %v704, 2147483648
      %v750 = vor.u32 1.1754944e-38, %v749
      %v751 = vsel %vm748, %v750, %v746
      %v752 = vmul.f32 %v693, %v751
      %v753 = vrcp.pop %v707
      %v754 = vmul.f32 %v707, %v753
      %v755 = vsub.f32 1.0, %v754
      %v756 = vmul.f32 %v753, %v755
      %v757 = vadd.f32 %v753, %v756
      %vm758 = vweird.f32 %v707
      %vm759 = vweird.f32 %v753
      %vm760 = vmor %vm758, %vm759
      %v761 = vsel %vm760, %v753, %v757
      %v762 = vand.u32 2147483647, %v707
      %vm763 = vcmp.eq.f32.partialorder %v762, 8.507059e+37
      %v764 = vand.u32 %v707, 2147483648
      %v765 = vor.u32 1.1754944e-38, %v764
      %v766 = vsel %vm763, %v765, %v761
      %v767 = vmul.f32 %v695, %v766
      %v769 = vsel %vm671, %v722, 0
      %771 = vmatpush.msra.mxu0 0.0
      %772 = vmatpush.msra.mxu0 0.0
      %773 = vmatpush.msra.mxu0 0.0
      %774 = vmatpush.msra.mxu0 0.0
      %775 = vmatpush.msra.mxu0 0.0
      %776 = vmatpush.msra.mxu0 0.0
      %777 = vmatpush.msra.mxu0 0.0
      %778 = vmatpush.msra.mxu0 0.0
      %779 = vmatpush.msra.mxu0 0.0
      %780 = vmatpush.msra.mxu0 0.0
      %781 = vmatpush.msra.mxu0 0.0
      %782 = vmatpush.msra.mxu0 0.0
      %783 = vmatpush.msra.mxu0 0.0
      %784 = vmatpush.msra.mxu0 0.0
      %785 = vmatpush.msra.mxu0 0.0
      %786 = vmatpush.msra.mxu0 %v535
      %787 = vmatmul.f32.gmra.mxu0 %v769
      %v788 = vpop.f32.mrf.mxu0
      %v789 = vadd.f32 0.0, %v788
      %790 = vdwg.mxu0
      %v792 = vsel %vm671, %v737, 0
      %794 = vmatpush.msra.mxu0 0.0
      %795 = vmatpush.msra.mxu0 0.0
      %796 = vmatpush.msra.mxu0 0.0
      %797 = vmatpush.msra.mxu0 0.0
      %798 = vmatpush.msra.mxu0 0.0
      %799 = vmatpush.msra.mxu0 0.0
      %800 = vmatpush.msra.mxu0 0.0
      %801 = vmatpush.msra.mxu0 0.0
      %802 = vmatpush.msra.mxu0 0.0
      %803 = vmatpush.msra.mxu0 0.0
      %804 = vmatpush.msra.mxu0 0.0
      %805 = vmatpush.msra.mxu0 0.0
      %806 = vmatpush.msra.mxu0 0.0
      %807 = vmatpush.msra.mxu0 0.0
      %808 = vmatpush.msra.mxu0 0.0
      %809 = vmatpush.msra.mxu0 %v538
      %810 = vmatmul.f32.gmra.mxu0 %v792
      %v811 = vpop.f32.mrf.mxu0
      %v812 = vadd.f32 0.0, %v811
      %813 = vdwg.mxu0
      %v815 = vsel %vm671, %v752, 0
      %817 = vmatpush.msra.mxu0 0.0
      %818 = vmatpush.msra.mxu0 0.0
      %819 = vmatpush.msra.mxu0 0.0
      %820 = vmatpush.msra.mxu0 0.0
      %821 = vmatpush.msra.mxu0 0.0
      %822 = vmatpush.msra.mxu0 0.0
      %823 = vmatpush.msra.mxu0 0.0
      %824 = vmatpush.msra.mxu0 0.0
      %825 = vmatpush.msra.mxu0 0.0
      %826 = vmatpush.msra.mxu0 0.0
      %827 = vmatpush.msra.mxu0 0.0
      %828 = vmatpush.msra.mxu0 0.0
      %829 = vmatpush.msra.mxu0 0.0
      %830 = vmatpush.msra.mxu0 0.0
      %831 = vmatpush.msra.mxu0 0.0
      %832 = vmatpush.msra.mxu0 %v541
      %833 = vmatmul.f32.gmra.mxu0 %v815
      %v834 = vpop.f32.mrf.mxu0
      %v835 = vadd.f32 0.0, %v834
      %836 = vdwg.mxu0
      %v838 = vsel %vm671, %v767, 0
      %840 = vmatpush.msra.mxu0 0.0
      %841 = vmatpush.msra.mxu0 0.0
      %842 = vmatpush.msra.mxu0 0.0
      %843 = vmatpush.msra.mxu0 0.0
      %844 = vmatpush.msra.mxu0 0.0
      %845 = vmatpush.msra.mxu0 0.0
      %846 = vmatpush.msra.mxu0 0.0
      %847 = vmatpush.msra.mxu0 0.0
      %848 = vmatpush.msra.mxu0 0.0
      %849 = vmatpush.msra.mxu0 0.0
      %850 = vmatpush.msra.mxu0 0.0
      %851 = vmatpush.msra.mxu0 0.0
      %852 = vmatpush.msra.mxu0 0.0
      %853 = vmatpush.msra.mxu0 0.0
      %854 = vmatpush.msra.mxu0 0.0
      %855 = vmatpush.msra.mxu0 %v544
      %856 = vmatmul.f32.gmra.mxu0 %v838
      %v857 = vpop.f32.mrf.mxu0
      %v858 = vadd.f32 0.0, %v857
      %859 = vdwg.mxu0
      %v860 = vperm.slane %v412, 1
      %861 = vmatpush.msra.mxu0 0.0
      %862 = vmatpush.msra.mxu0 0.0
      %863 = vmatpush.msra.mxu0 0.0
      %864 = vmatpush.msra.mxu0 0.0
      %865 = vmatpush.msra.mxu0 0.0
      %866 = vmatpush.msra.mxu0 0.0
      %867 = vmatpush.msra.mxu0 0.0
      %868 = vmatpush.msra.mxu0 0.0
      %869 = vmatpush.msra.mxu0 0.0
      %870 = vmatpush.msra.mxu0 0.0
      %871 = vmatpush.msra.mxu0 0.0
      %872 = vmatpush.msra.mxu0 0.0
      %873 = vmatpush.msra.mxu0 %v395
      %874 = vmatpush.msra.mxu0 %v394
      %875 = vmatpush.msra.mxu0 %v393
      %876 = vmatpush.msra.mxu0 %v392
      %877 = vmatmul.f32.gmra.mxu0 %v446
      %v878 = vpop.f32.mrf.mxu0
      %v879 = vadd.f32 %v860, %v878
      %880 = vmatmul.f32.gmra.mxu0 %v449
      %v881 = vpop.f32.mrf.mxu0
      %v882 = vadd.f32 %v860, %v881
      %883 = vmatmul.f32.gmra.mxu0 %v452
      %v884 = vpop.f32.mrf.mxu0
      %v885 = vadd.f32 %v860, %v884
      %886 = vmatmul.f32.gmra.mxu0 %v455
      %v887 = vpop.f32.mrf.mxu0
      %v888 = vadd.f32 %v860, %v887
      %889 = vdwg.mxu0
      %v890 = vperm.slane %v412, 3
      %891 = vmatpush.msra.mxu0 0.0
      %892 = vmatpush.msra.mxu0 0.0
      %893 = vmatpush.msra.mxu0 0.0
      %894 = vmatpush.msra.mxu0 0.0
      %895 = vmatpush.msra.mxu0 0.0
      %896 = vmatpush.msra.mxu0 0.0
      %897 = vmatpush.msra.mxu0 0.0
      %898 = vmatpush.msra.mxu0 0.0
      %899 = vmatpush.msra.mxu0 0.0
      %900 = vmatpush.msra.mxu0 0.0
      %901 = vmatpush.msra.mxu0 0.0
      %902 = vmatpush.msra.mxu0 0.0
      %903 = vmatpush.msra.mxu0 %v403
      %904 = vmatpush.msra.mxu0 %v402
      %905 = vmatpush.msra.mxu0 %v401
      %906 = vmatpush.msra.mxu0 %v400
      %907 = vmatmul.f32.gmra.mxu0 %v446
      %v908 = vpop.f32.mrf.mxu0
      %v909 = vadd.f32 %v890, %v908
      %910 = vmatmul.f32.gmra.mxu0 %v449
      %v911 = vpop.f32.mrf.mxu0
      %v912 = vadd.f32 %v890, %v911
      %913 = vmatmul.f32.gmra.mxu0 %v452
      %v914 = vpop.f32.mrf.mxu0
      %v915 = vadd.f32 %v890, %v914
      %916 = vmatmul.f32.gmra.mxu0 %v455
      %v917 = vpop.f32.mrf.mxu0
      %v918 = vadd.f32 %v890, %v917
      %919 = vdwg.mxu0
      %v920 = vperm.slane %v412, 5
      %921 = vmatpush.msra.mxu0 0.0
      %922 = vmatpush.msra.mxu0 0.0
      %923 = vmatpush.msra.mxu0 0.0
      %924 = vmatpush.msra.mxu0 0.0
      %925 = vmatpush.msra.mxu0 0.0
      %926 = vmatpush.msra.mxu0 0.0
      %927 = vmatpush.msra.mxu0 0.0
      %928 = vmatpush.msra.mxu0 0.0
      %929 = vmatpush.msra.mxu0 0.0
      %930 = vmatpush.msra.mxu0 0.0
      %931 = vmatpush.msra.mxu0 0.0
      %932 = vmatpush.msra.mxu0 0.0
      %933 = vmatpush.msra.mxu0 %v411
      %934 = vmatpush.msra.mxu0 %v410
      %935 = vmatpush.msra.mxu0 %v409
      %936 = vmatpush.msra.mxu0 %v408
      %937 = vmatmul.f32.gmra.mxu0 %v446
      %v938 = vpop.f32.mrf.mxu0
      %v939 = vadd.f32 %v920, %v938
      %940 = vmatmul.f32.gmra.mxu0 %v449
      %v941 = vpop.f32.mrf.mxu0
      %v942 = vadd.f32 %v920, %v941
      %943 = vmatmul.f32.gmra.mxu0 %v452
      %v944 = vpop.f32.mrf.mxu0
      %v945 = vadd.f32 %v920, %v944
      %946 = vmatmul.f32.gmra.mxu0 %v455
      %v947 = vpop.f32.mrf.mxu0
      %v948 = vadd.f32 %v920, %v947
      %949 = vdwg.mxu0
      %v951 = vsel %vm546, %v879, 0
      %v954 = vsel %vm546, %v909, 0
      %956 = vmatpush.xpose.msra.mxu0 0.0
      %957 = vmatpush.xpose.msra.mxu0 0.0
      %958 = vmatpush.xpose.msra.mxu0 0.0
      %959 = vmatpush.xpose.msra.mxu0 0.0
      %960 = vmatpush.xpose.msra.mxu0 0.0
      %961 = vmatpush.xpose.msra.mxu0 0.0
      %962 = vmatpush.xpose.msra.mxu0 0.0
      %963 = vmatpush.xpose.msra.mxu0 0.0
      %964 = vmatpush.xpose.msra.mxu0 0.0
      %965 = vmatpush.xpose.msra.mxu0 0.0
      %966 = vmatpush.xpose.msra.mxu0 0.0
      %967 = vmatpush.xpose.msra.mxu0 0.0
      %968 = vmatpush.xpose.msra.mxu0 0.0
      %969 = vmatpush.xpose.msra.mxu0 0.0
      %970 = vmatpush.xpose.msra.mxu0 0.0
      %971 = vmatpush.xpose.msra.mxu0 %v954
      %972 = vmatmul.f32.gmra.mxu0 %v951
      %v973 = vpop.f32.mrf.mxu0
      %v974 = vadd.f32 0.0, %v973
      %975 = vdwg.mxu0
      %v977 = vsel %vm546, %v882, 0
      %v980 = vsel %vm546, %v912, 0
      %982 = vmatpush.xpose.msra.mxu0 0.0
      %983 = vmatpush.xpose.msra.mxu0 0.0
      %984 = vmatpush.xpose.msra.mxu0 0.0
      %985 = vmatpush.xpose.msra.mxu0 0.0
      %986 = vmatpush.xpose.msra.mxu0 0.0
      %987 = vmatpush.xpose.msra.mxu0 0.0
      %988 = vmatpush.xpose.msra.mxu0 0.0
      %989 = vmatpush.xpose.msra.mxu0 0.0
      %990 = vmatpush.xpose.msra.mxu0 0.0
      %991 = vmatpush.xpose.msra.mxu0 0.0
      %992 = vmatpush.xpose.msra.mxu0 0.0
      %993 = vmatpush.xpose.msra.mxu0 0.0
      %994 = vmatpush.xpose.msra.mxu0 0.0
      %995 = vmatpush.xpose.msra.mxu0 0.0
      %996 = vmatpush.xpose.msra.mxu0 0.0
      %997 = vmatpush.xpose.msra.mxu0 %v980
      %998 = vmatmul.f32.gmra.mxu0 %v977
      %v999 = vpop.f32.mrf.mxu0
      %v1000 = vadd.f32 0.0, %v999
      %1001 = vdwg.mxu0
      %v1003 = vsel %vm546, %v885, 0
      %v1006 = vsel %vm546, %v915, 0
      %1008 = vmatpush.xpose.msra.mxu0 0.0
      %1009 = vmatpush.xpose.msra.mxu0 0.0
      %1010 = vmatpush.xpose.msra.mxu0 0.0
      %1011 = vmatpush.xpose.msra.mxu0 0.0
      %1012 = vmatpush.xpose.msra.mxu0 0.0
      %1013 = vmatpush.xpose.msra.mxu0 0.0
      %1014 = vmatpush.xpose.msra.mxu0 0.0
      %1015 = vmatpush.xpose.msra.mxu0 0.0
      %1016 = vmatpush.xpose.msra.mxu0 0.0
      %1017 = vmatpush.xpose.msra.mxu0 0.0
      %1018 = vmatpush.xpose.msra.mxu0 0.0
      %1019 = vmatpush.xpose.msra.mxu0 0.0
      %1020 = vmatpush.xpose.msra.mxu0 0.0
      %1021 = vmatpush.xpose.msra.mxu0 0.0
      %1022 = vmatpush.xpose.msra.mxu0 0.0
      %1023 = vmatpush.xpose.msra.mxu0 %v1006
      %1024 = vmatmul.f32.gmra.mxu0 %v1003
      %v1025 = vpop.f32.mrf.mxu0
      %v1026 = vadd.f32 0.0, %v1025
      %1027 = vdwg.mxu0
      %v1029 = vsel %vm546, %v888, 0
      %v1032 = vsel %vm546, %v918, 0
      %1034 = vmatpush.xpose.msra.mxu0 0.0
      %1035 = vmatpush.xpose.msra.mxu0 0.0
      %1036 = vmatpush.xpose.msra.mxu0 0.0
      %1037 = vmatpush.xpose.msra.mxu0 0.0
      %1038 = vmatpush.xpose.msra.mxu0 0.0
      %1039 = vmatpush.xpose.msra.mxu0 0.0
      %1040 = vmatpush.xpose.msra.mxu0 0.0
      %1041 = vmatpush.xpose.msra.mxu0 0.0
      %1042 = vmatpush.xpose.msra.mxu0 0.0
      %1043 = vmatpush.xpose.msra.mxu0 0.0
      %1044 = vmatpush.xpose.msra.mxu0 0.0
      %1045 = vmatpush.xpose.msra.mxu0 0.0
      %1046 = vmatpush.xpose.msra.mxu0 0.0
      %1047 = vmatpush.xpose.msra.mxu0 0.0
      %1048 = vmatpush.xpose.msra.mxu0 0.0
      %1049 = vmatpush.xpose.msra.mxu0 %v1032
      %1050 = vmatmul.f32.gmra.mxu0 %v1029
      %v1051 = vpop.f32.mrf.mxu0
      %v1052 = vadd.f32 0.0, %v1051
      %1053 = vdwg.mxu0
      %v1054 = vmul.f32 %v974, 0.25
      %v1055 = vmul.f32 %v1000, 0.25
      %v1056 = vmul.f32 %v1026, 0.25
      %v1057 = vmul.f32 %v1052, 0.25
      %v1058 = vadd.f32 %v1054, %v659
      %v1059 = vadd.f32 %v1055, %v660
      %v1060 = vadd.f32 %v1056, %v661
      %v1061 = vadd.f32 %v1057, %v662
      %v1062 = vsel %vm671, %v1058, -inf
      %1063 = vmax.xlane.f32.xlu0 %v1062
      %v1064 = vpop.xlane.xlu0 %1063
      %v1065 = vsel %vm671, %v1059, -inf
      %1066 = vmax.xlane.f32.xlu0 %v1065
      %v1067 = vpop.xlane.xlu0 %1066
      %v1068 = vsel %vm671, %v1060, -inf
      %1069 = vmax.xlane.f32.xlu0 %v1068
      %v1070 = vpop.xlane.xlu0 %1069
      %v1071 = vsel %vm671, %v1061, -inf
      %1072 = vmax.xlane.f32.xlu0 %v1071
      %v1073 = vpop.xlane.xlu0 %1072
      %v1074 = vsub.f32 %v1058, %v1064
      %v1075 = vsub.f32 %v1059, %v1067
      %v1076 = vsub.f32 %v1060, %v1070
      %v1077 = vsub.f32 %v1061, %v1073
      %v1078 = vmul.f32 %v1074, 1.442695
      %v1079 = vpow.pop %v1078
      %v1080 = vmul.f32 %v1075, 1.442695
      %v1081 = vpow.pop %v1080
      %v1082 = vmul.f32 %v1076, 1.442695
      %v1083 = vpow.pop %v1082
      %v1084 = vmul.f32 %v1077, 1.442695
      %v1085 = vpow.pop %v1084
      %v1086 = vsel %vm671, %v1079, 0.0
      %1087 = vadd.xlane.f32.xlu0 %v1086
      %v1088 = vpop.xlane.xlu0 %1087
      %v1089 = vsel %vm671, %v1081, 0.0
      %1090 = vadd.xlane.f32.xlu0 %v1089
      %v1091 = vpop.xlane.xlu0 %1090
      %v1092 = vsel %vm671, %v1083, 0.0
      %1093 = vadd.xlane.f32.xlu0 %v1092
      %v1094 = vpop.xlane.xlu0 %1093
      %v1095 = vsel %vm671, %v1085, 0.0
      %1096 = vadd.xlane.f32.xlu0 %v1095
      %v1097 = vpop.xlane.xlu0 %1096
      %v1098 = vrcp.pop %v1088
      %v1099 = vmul.f32 %v1088, %v1098
      %v1100 = vsub.f32 1.0, %v1099
      %v1101 = vmul.f32 %v1098, %v1100
      %v1102 = vadd.f32 %v1098, %v1101
      %vm1103 = vweird.f32 %v1088
      %vm1104 = vweird.f32 %v1098
      %vm1105 = vmor %vm1103, %vm1104
      %v1106 = vsel %vm1105, %v1098, %v1102
      %v1107 = vand.u32 2147483647, %v1088
      %vm1108 = vcmp.eq.f32.partialorder %v1107, 8.507059e+37
      %v1109 = vand.u32 %v1088, 2147483648
      %v1110 = vor.u32 1.1754944e-38, %v1109
      %v1111 = vsel %vm1108, %v1110, %v1106
      %v1112 = vmul.f32 %v1079, %v1111
      %v1113 = vrcp.pop %v1091
      %v1114 = vmul.f32 %v1091, %v1113
      %v1115 = vsub.f32 1.0, %v1114
      %v1116 = vmul.f32 %v1113, %v1115
      %v1117 = vadd.f32 %v1113, %v1116
      %vm1118 = vweird.f32 %v1091
      %vm1119 = vweird.f32 %v1113
      %vm1120 = vmor %vm1118, %vm1119
      %v1121 = vsel %vm1120, %v1113, %v1117
      %v1122 = vand.u32 2147483647, %v1091
      %vm1123 = vcmp.eq.f32.partialorder %v1122, 8.507059e+37
      %v1124 = vand.u32 %v1091, 2147483648
      %v1125 = vor.u32 1.1754944e-38, %v1124
      %v1126 = vsel %vm1123, %v1125, %v1121
      %v1127 = vmul.f32 %v1081, %v1126
      %v1128 = vrcp.pop %v1094
      %v1129 = vmul.f32 %v1094, %v1128
      %v1130 = vsub.f32 1.0, %v1129
      %v1131 = vmul.f32 %v1128, %v1130
      %v1132 = vadd.f32 %v1128, %v1131
      %vm1133 = vweird.f32 %v1094
      %vm1134 = vweird.f32 %v1128
      %vm1135 = vmor %vm1133, %vm1134
      %v1136 = vsel %vm1135, %v1128, %v1132
      %v1137 = vand.u32 2147483647, %v1094
      %vm1138 = vcmp.eq.f32.partialorder %v1137, 8.507059e+37
      %v1139 = vand.u32 %v1094, 2147483648
      %v1140 = vor.u32 1.1754944e-38, %v1139
      %v1141 = vsel %vm1138, %v1140, %v1136
      %v1142 = vmul.f32 %v1083, %v1141
      %v1143 = vrcp.pop %v1097
      %v1144 = vmul.f32 %v1097, %v1143
      %v1145 = vsub.f32 1.0, %v1144
      %v1146 = vmul.f32 %v1143, %v1145
      %v1147 = vadd.f32 %v1143, %v1146
      %vm1148 = vweird.f32 %v1097
      %vm1149 = vweird.f32 %v1143
      %vm1150 = vmor %vm1148, %vm1149
      %v1151 = vsel %vm1150, %v1143, %v1147
      %v1152 = vand.u32 2147483647, %v1097
      %vm1153 = vcmp.eq.f32.partialorder %v1152, 8.507059e+37
      %v1154 = vand.u32 %v1097, 2147483648
      %v1155 = vor.u32 1.1754944e-38, %v1154
      %v1156 = vsel %vm1153, %v1155, %v1151
      %v1157 = vmul.f32 %v1085, %v1156
      %v1159 = vsel %vm671, %v1112, 0
      %1161 = vmatpush.msra.mxu0 0.0
      %1162 = vmatpush.msra.mxu0 0.0
      %1163 = vmatpush.msra.mxu0 0.0
      %1164 = vmatpush.msra.mxu0 0.0
      %1165 = vmatpush.msra.mxu0 0.0
      %1166 = vmatpush.msra.mxu0 0.0
      %1167 = vmatpush.msra.mxu0 0.0
      %1168 = vmatpush.msra.mxu0 0.0
      %1169 = vmatpush.msra.mxu0 0.0
      %1170 = vmatpush.msra.mxu0 0.0
      %1171 = vmatpush.msra.mxu0 0.0
      %1172 = vmatpush.msra.mxu0 0.0
      %1173 = vmatpush.msra.mxu0 0.0
      %1174 = vmatpush.msra.mxu0 0.0
      %1175 = vmatpush.msra.mxu0 0.0
      %1176 = vmatpush.msra.mxu0 %v939
      %1177 = vmatmul.f32.gmra.mxu0 %v1159
      %v1178 = vpop.f32.mrf.mxu0
      %v1179 = vadd.f32 0.0, %v1178
      %1180 = vdwg.mxu0
      %v1182 = vsel %vm671, %v1127, 0
      %1184 = vmatpush.msra.mxu0 0.0
      %1185 = vmatpush.msra.mxu0 0.0
      %1186 = vmatpush.msra.mxu0 0.0
      %1187 = vmatpush.msra.mxu0 0.0
      %1188 = vmatpush.msra.mxu0 0.0
      %1189 = vmatpush.msra.mxu0 0.0
      %1190 = vmatpush.msra.mxu0 0.0
      %1191 = vmatpush.msra.mxu0 0.0
      %1192 = vmatpush.msra.mxu0 0.0
      %1193 = vmatpush.msra.mxu0 0.0
      %1194 = vmatpush.msra.mxu0 0.0
      %1195 = vmatpush.msra.mxu0 0.0
      %1196 = vmatpush.msra.mxu0 0.0
      %1197 = vmatpush.msra.mxu0 0.0
      %1198 = vmatpush.msra.mxu0 0.0
      %1199 = vmatpush.msra.mxu0 %v942
      %1200 = vmatmul.f32.gmra.mxu0 %v1182
      %v1201 = vpop.f32.mrf.mxu0
      %v1202 = vadd.f32 0.0, %v1201
      %1203 = vdwg.mxu0
      %v1205 = vsel %vm671, %v1142, 0
      %1207 = vmatpush.msra.mxu0 0.0
      %1208 = vmatpush.msra.mxu0 0.0
      %1209 = vmatpush.msra.mxu0 0.0
      %1210 = vmatpush.msra.mxu0 0.0
      %1211 = vmatpush.msra.mxu0 0.0
      %1212 = vmatpush.msra.mxu0 0.0
      %1213 = vmatpush.msra.mxu0 0.0
      %1214 = vmatpush.msra.mxu0 0.0
      %1215 = vmatpush.msra.mxu0 0.0
      %1216 = vmatpush.msra.mxu0 0.0
      %1217 = vmatpush.msra.mxu0 0.0
      %1218 = vmatpush.msra.mxu0 0.0
      %1219 = vmatpush.msra.mxu0 0.0
      %1220 = vmatpush.msra.mxu0 0.0
      %1221 = vmatpush.msra.mxu0 0.0
      %1222 = vmatpush.msra.mxu0 %v945
      %1223 = vmatmul.f32.gmra.mxu0 %v1205
      %v1224 = vpop.f32.mrf.mxu0
      %v1225 = vadd.f32 0.0, %v1224
      %1226 = vdwg.mxu0
      %v1228 = vsel %vm671, %v1157, 0
      %1230 = vmatpush.msra.mxu0 0.0
      %1231 = vmatpush.msra.mxu0 0.0
      %1232 = vmatpush.msra.mxu0 0.0
      %1233 = vmatpush.msra.mxu0 0.0
      %1234 = vmatpush.msra.mxu0 0.0
      %1235 = vmatpush.msra.mxu0 0.0
      %1236 = vmatpush.msra.mxu0 0.0
      %1237 = vmatpush.msra.mxu0 0.0
      %1238 = vmatpush.msra.mxu0 0.0
      %1239 = vmatpush.msra.mxu0 0.0
      %1240 = vmatpush.msra.mxu0 0.0
      %1241 = vmatpush.msra.mxu0 0.0
      %1242 = vmatpush.msra.mxu0 0.0
      %1243 = vmatpush.msra.mxu0 0.0
      %1244 = vmatpush.msra.mxu0 0.0
      %1245 = vmatpush.msra.mxu0 %v948
      %1246 = vmatmul.f32.gmra.mxu0 %v1228
      %v1247 = vpop.f32.mrf.mxu0
      %v1248 = vadd.f32 0.0, %v1247
      %1249 = vdwg.mxu0
      %v1251 = vsel %vm546, %v1179, 0
      %v1254 = vsel %vm546, %v1202, 0
      %v1257 = vsel %vm546, %v1225, 0
      %v1260 = vsel %vm546, %v1248, 0
      %1262 = vmatpush.msra.mxu0 0.0
      %1263 = vmatpush.msra.mxu0 0.0
      %1264 = vmatpush.msra.mxu0 0.0
      %1265 = vmatpush.msra.mxu0 0.0
      %1266 = vmatpush.msra.mxu0 0.0
      %1267 = vmatpush.msra.mxu0 0.0
      %1268 = vmatpush.msra.mxu0 0.0
      %1269 = vmatpush.msra.mxu0 0.0
      %1270 = vmatpush.msra.mxu0 0.0
      %1271 = vmatpush.msra.mxu0 0.0
      %1272 = vmatpush.msra.mxu0 0.0
      %1273 = vmatpush.msra.mxu0 0.0
      %1274 = vmatpush.msra.mxu0 0.0
      %1275 = vmatpush.msra.mxu0 0.0
      %1276 = vmatpush.msra.mxu0 %v416
      %1277 = vmatpush.msra.mxu0 %v415
      %1278 = vmatmul.f32.gmra.mxu0 %v1251
      %v1279 = vpop.f32.mrf.mxu0
      %v1280 = vadd.f32 0.0, %v1279
      %1281 = vmatmul.f32.gmra.mxu0 %v1254
      %v1282 = vpop.f32.mrf.mxu0
      %v1283 = vadd.f32 0.0, %v1282
      %1284 = vmatmul.f32.gmra.mxu0 %v1257
      %v1285 = vpop.f32.mrf.mxu0
      %v1286 = vadd.f32 0.0, %v1285
      %1287 = vmatmul.f32.gmra.mxu0 %v1260
      %v1288 = vpop.f32.mrf.mxu0
      %v1289 = vadd.f32 0.0, %v1288
      %1290 = vdwg.mxu0
      %v1292 = vsel %vm546, %v789, 0
      %v1295 = vsel %vm546, %v812, 0
      %v1298 = vsel %vm546, %v835, 0
      %v1301 = vsel %vm546, %v858, 0
      %1303 = vmatpush.msra.mxu0 0.0
      %1304 = vmatpush.msra.mxu0 0.0
      %1305 = vmatpush.msra.mxu0 0.0
      %1306 = vmatpush.msra.mxu0 0.0
      %1307 = vmatpush.msra.mxu0 0.0
      %1308 = vmatpush.msra.mxu0 0.0
      %1309 = vmatpush.msra.mxu0 0.0
      %1310 = vmatpush.msra.mxu0 0.0
      %1311 = vmatpush.msra.mxu0 0.0
      %1312 = vmatpush.msra.mxu0 0.0
      %1313 = vmatpush.msra.mxu0 0.0
      %1314 = vmatpush.msra.mxu0 0.0
      %1315 = vmatpush.msra.mxu0 0.0
      %1316 = vmatpush.msra.mxu0 0.0
      %1317 = vmatpush.msra.mxu0 %v414
      %1318 = vmatpush.msra.mxu0 %v413
      %1319 = vmatmul.f32.gmra.mxu0 %v1292
      %v1320 = vpop.f32.mrf.mxu0
      %v1321 = vadd.f32 %v1280, %v1320
      %1322 = vmatmul.f32.gmra.mxu0 %v1295
      %v1323 = vpop.f32.mrf.mxu0
      %v1324 = vadd.f32 %v1283, %v1323
      %1325 = vmatmul.f32.gmra.mxu0 %v1298
      %v1326 = vpop.f32.mrf.mxu0
      %v1327 = vadd.f32 %v1286, %v1326
      %1328 = vmatmul.f32.gmra.mxu0 %v1301
      %v1329 = vpop.f32.mrf.mxu0
      %v1330 = vadd.f32 %v1289, %v1329
      %1331 = vdwg.mxu0
      %v1332 = vperm.slane %v434, 0
      %v1333 = vadd.f32 %v1321, %v1332
      %v1334 = vadd.f32 %v1324, %v1332
      %v1335 = vadd.f32 %v1327, %v1332
      %v1336 = vadd.f32 %v1330, %v1332
      %v1337 = vadd.f32 %v380, %v1333
      %v1338 = vadd.f32 %v381, %v1334
      %v1339 = vadd.f32 %v382, %v1335
      %v1340 = vadd.f32 %v383, %v1336
      %v1341 = vsel %vm444, %v1337, 0.0
      %1342 = vadd.xlane.f32.xlu0 %v1341
      %v1343 = vpop.xlane.xlu0 %1342
      %v1344 = vsel %vm444, %v1338, 0.0
      %1345 = vadd.xlane.f32.xlu0 %v1344
      %v1346 = vpop.xlane.xlu0 %1345
      %v1347 = vsel %vm444, %v1339, 0.0
      %1348 = vadd.xlane.f32.xlu0 %v1347
      %v1349 = vpop.xlane.xlu0 %1348
      %v1350 = vsel %vm444, %v1340, 0.0
      %1351 = vadd.xlane.f32.xlu0 %v1350
      %v1352 = vpop.xlane.xlu0 %1351
      %v1353 = vrcp.pop 32.0
      %v1354 = vmul.f32 32.0, %v1353
      %v1355 = vsub.f32 1.0, %v1354
      %v1356 = vmul.f32 %v1353, %v1355
      %v1357 = vadd.f32 %v1353, %v1356
      %vm1358 = vweird.f32 %v1353
      %v1359 = vsel %vm1358, %v1353, %v1357
      %v1360 = vmul.f32 %v1343, %v1359
      %v1361 = vmul.f32 %v1346, %v1359
      %v1362 = vmul.f32 %v1349, %v1359
      %v1363 = vmul.f32 %v1352, %v1359
      %v1364 = vsub.f32 %v1337, %v1360
      %v1365 = vsub.f32 %v1338, %v1361
      %v1366 = vsub.f32 %v1339, %v1362
      %v1367 = vsub.f32 %v1340, %v1363
      %v1368 = vmul.f32 %v1364, %v1364
      %v1369 = vmul.f32 %v1365, %v1365
      %v1370 = vmul.f32 %v1366, %v1366
      %v1371 = vmul.f32 %v1367, %v1367
      %v1372 = vsel %vm444, %v1368, 0.0
      %1373 = vadd.xlane.f32.xlu0 %v1372
      %v1374 = vpop.xlane.xlu0 %1373
      %v1375 = vsel %vm444, %v1369, 0.0
      %1376 = vadd.xlane.f32.xlu0 %v1375
      %v1377 = vpop.xlane.xlu0 %1376
      %v1378 = vsel %vm444, %v1370, 0.0
      %1379 = vadd.xlane.f32.xlu0 %v1378
      %v1380 = vpop.xlane.xlu0 %1379
      %v1381 = vsel %vm444, %v1371, 0.0
      %1382 = vadd.xlane.f32.xlu0 %v1381
      %v1383 = vpop.xlane.xlu0 %1382
      %v1384 = vmul.f32 %v1374, %v1359
      %v1385 = vmul.f32 %v1377, %v1359
      %v1386 = vmul.f32 %v1380, %v1359
      %v1387 = vmul.f32 %v1383, %v1359
      %v1388 = vadd.f32 %v1384, 1e-12
      %v1389 = vadd.f32 %v1385, 1e-12
      %v1390 = vadd.f32 %v1386, 1e-12
      %v1391 = vadd.f32 %v1387, 1e-12
      %v1392 = vrsqrt.pop %v1388
      %v1393 = vmul.f32 %v1392, %v1388
      %v1394 = vmul.f32 %v1393, %v1392
      %v1395 = vmul.f32 0.5, %v1394
      %v1396 = vsub.f32 1.5, %v1395
      %v1397 = vmul.f32 %v1392, %v1396
      %vm1398 = vweird.f32 %v1388
      %vm1399 = vweird.f32 %v1392
      %vm1400 = vmor %vm1398, %vm1399
      %v1401 = vsel %vm1400, %v1392, %v1397
      %v1402 = vrsqrt.pop %v1389
      %v1403 = vmul.f32 %v1402, %v1389
      %v1404 = vmul.f32 %v1403, %v1402
      %v1405 = vmul.f32 0.5, %v1404
      %v1406 = vsub.f32 1.5, %v1405
      %v1407 = vmul.f32 %v1402, %v1406
      %vm1408 = vweird.f32 %v1389
      %vm1409 = vweird.f32 %v1402
      %vm1410 = vmor %vm1408, %vm1409
      %v1411 = vsel %vm1410, %v1402, %v1407
      %v1412 = vrsqrt.pop %v1390
      %v1413 = vmul.f32 %v1412, %v1390
      %v1414 = vmul.f32 %v1413, %v1412
      %v1415 = vmul.f32 0.5, %v1414
      %v1416 = vsub.f32 1.5, %v1415
      %v1417 = vmul.f32 %v1412, %v1416
      %vm1418 = vweird.f32 %v1390
      %vm1419 = vweird.f32 %v1412
      %vm1420 = vmor %vm1418, %vm1419
      %v1421 = vsel %vm1420, %v1412, %v1417
      %v1422 = vrsqrt.pop %v1391
      %v1423 = vmul.f32 %v1422, %v1391
      %v1424 = vmul.f32 %v1423, %v1422
      %v1425 = vmul.f32 0.5, %v1424
      %v1426 = vsub.f32 1.5, %v1425
      %v1427 = vmul.f32 %v1422, %v1426
      %vm1428 = vweird.f32 %v1391
      %vm1429 = vweird.f32 %v1422
      %vm1430 = vmor %vm1428, %vm1429
      %v1431 = vsel %vm1430, %v1422, %v1427
      %v1432 = vmul.f32 %v1364, %v1401
      %v1433 = vmul.f32 %v1365, %v1411
      %v1434 = vmul.f32 %v1366, %v1421
      %v1435 = vmul.f32 %v1367, %v1431
      %v1436 = vperm.slane %v434, 1
      %v1437 = vmul.f32 %v1432, %v1436
      %v1438 = vmul.f32 %v1433, %v1436
      %v1439 = vmul.f32 %v1434, %v1436
      %v1440 = vmul.f32 %v1435, %v1436
      %v1441 = vperm.slane %v434, 2
      %v1442 = vadd.f32 %v1437, %v1441
      %v1443 = vadd.f32 %v1438, %v1441
      %v1444 = vadd.f32 %v1439, %v1441
      %v1445 = vadd.f32 %v1440, %v1441
      %v1447 = vperm.slane %v421, 0
      %v1450 = vsel %vm444, %v1442, 0
      %v1453 = vsel %vm444, %v1443, 0
      %v1456 = vsel %vm444, %v1444, 0
      %v1459 = vsel %vm444, %v1445, 0
      %1461 = vmatpush.msra.mxu0 0.0
      %1462 = vmatpush.msra.mxu0 0.0
      %1463 = vmatpush.msra.mxu0 0.0
      %1464 = vmatpush.msra.mxu0 0.0
      %1465 = vmatpush.msra.mxu0 0.0
      %1466 = vmatpush.msra.mxu0 0.0
      %1467 = vmatpush.msra.mxu0 0.0
      %1468 = vmatpush.msra.mxu0 0.0
      %1469 = vmatpush.msra.mxu0 0.0
      %1470 = vmatpush.msra.mxu0 0.0
      %1471 = vmatpush.msra.mxu0 0.0
      %1472 = vmatpush.msra.mxu0 0.0
      %1473 = vmatpush.msra.mxu0 %v420
      %1474 = vmatpush.msra.mxu0 %v419
      %1475 = vmatpush.msra.mxu0 %v418
      %1476 = vmatpush.msra.mxu0 %v417
      %1477 = vmatmul.f32.gmra.mxu0 %v1450
      %v1478 = vpop.f32.mrf.mxu0
      %v1479 = vadd.f32 %v1447, %v1478
      %1480 = vmatmul.f32.gmra.mxu0 %v1453
      %v1481 = vpop.f32.mrf.mxu0
      %v1482 = vadd.f32 %v1447, %v1481
      %1483 = vmatmul.f32.gmra.mxu0 %v1456
      %v1484 = vpop.f32.mrf.mxu0
      %v1485 = vadd.f32 %v1447, %v1484
      %1486 = vmatmul.f32.gmra.mxu0 %v1459
      %v1487 = vpop.f32.mrf.mxu0
      %v1488 = vadd.f32 %v1447, %v1487
      %1489 = vdwg.mxu0
      %v1490 = vmul.f32 %v1479, %v1479
      %v1491 = vmul.f32 %v1482, %v1482
      %v1492 = vmul.f32 %v1485, %v1485
      %v1493 = vmul.f32 %v1488, %v1488
      %v1494 = vmul.f32 %v1479, %v1490
      %v1495 = vmul.f32 %v1482, %v1491
      %v1496 = vmul.f32 %v1485, %v1492
      %v1497 = vmul.f32 %v1488, %v1493
      %v1498 = vmul.f32 %v1494, 0.044715
      %v1499 = vmul.f32 %v1495, 0.044715
      %v1500 = vmul.f32 %v1496, 0.044715
      %v1501 = vmul.f32 %v1497, 0.044715
      %v1502 = vadd.f32 %v1479, %v1498
      %v1503 = vadd.f32 %v1482, %v1499
      %v1504 = vadd.f32 %v1485, %v1500
      %v1505 = vadd.f32 %v1488, %v1501
      %v1506 = vmul.f32 %v1502, 0.7978846
      %v1507 = vmul.f32 %v1503, 0.7978846
      %v1508 = vmul.f32 %v1504, 0.7978846
      %v1509 = vmul.f32 %v1505, 0.7978846
      %v1510 = vtanh.pop %v1506
      %v1511 = vtanh.pop %v1507
      %v1512 = vtanh.pop %v1508
      %v1513 = vtanh.pop %v1509
      %v1514 = vadd.f32 %v1510, 1.0
      %v1515 = vadd.f32 %v1511, 1.0
      %v1516 = vadd.f32 %v1512, 1.0
      %v1517 = vadd.f32 %v1513, 1.0
      %v1518 = vmul.f32 %v1514, 0.5
      %v1519 = vmul.f32 %v1515, 0.5
      %v1520 = vmul.f32 %v1516, 0.5
      %v1521 = vmul.f32 %v1517, 0.5
      %v1522 = vmul.f32 %v1479, %v1518
      %v1523 = vmul.f32 %v1482, %v1519
      %v1524 = vmul.f32 %v1485, %v1520
      %v1525 = vmul.f32 %v1488, %v1521
      %v1526 = vperm.slane %v434, 3
      %vm1527 = vcmask 523264
      %v1529 = vsel %vm1527, %v1522, 0
      %v1532 = vsel %vm1527, %v1523, 0
      %v1535 = vsel %vm1527, %v1524, 0
      %v1538 = vsel %vm1527, %v1525, 0
      %1540 = vmatpush.msra.mxu0 0.0
      %1541 = vmatpush.msra.mxu0 0.0
      %1542 = vmatpush.msra.mxu0 0.0
      %1543 = vmatpush.msra.mxu0 0.0
      %1544 = vmatpush.msra.mxu0 0.0
      %1545 = vmatpush.msra.mxu0 0.0
      %1546 = vmatpush.msra.mxu0 0.0
      %1547 = vmatpush.msra.mxu0 0.0
      %1548 = vmatpush.msra.mxu0 %v429
      %1549 = vmatpush.msra.mxu0 %v428
      %1550 = vmatpush.msra.mxu0 %v427
      %1551 = vmatpush.msra.mxu0 %v426
      %1552 = vmatpush.msra.mxu0 %v425
      %1553 = vmatpush.msra.mxu0 %v424
      %1554 = vmatpush.msra.mxu0 %v423
      %1555 = vmatpush.msra.mxu0 %v422
      %1556 = vmatmul.f32.gmra.mxu0 %v1529
      %v1557 = vpop.f32.mrf.mxu0
      %v1558 = vadd.f32 %v1526, %v1557
      %1559 = vmatmul.f32.gmra.mxu0 %v1532
      %v1560 = vpop.f32.mrf.mxu0
      %v1561 = vadd.f32 %v1526, %v1560
      %1562 = vmatmul.f32.gmra.mxu0 %v1535
      %v1563 = vpop.f32.mrf.mxu0
      %v1564 = vadd.f32 %v1526, %v1563
      %1565 = vmatmul.f32.gmra.mxu0 %v1538
      %v1566 = vpop.f32.mrf.mxu0
      %v1567 = vadd.f32 %v1526, %v1566
      %1568 = vdwg.mxu0
      %v1569 = vadd.f32 %v1442, %v1558
      %v1570 = vadd.f32 %v1443, %v1561
      %v1571 = vadd.f32 %v1444, %v1564
      %v1572 = vadd.f32 %v1445, %v1567
      %v1573 = vsel %vm444, %v1569, 0.0
      %1574 = vadd.xlane.f32.xlu0 %v1573
      %v1575 = vpop.xlane.xlu0 %1574
      %v1576 = vsel %vm444, %v1570, 0.0
      %1577 = vadd.xlane.f32.xlu0 %v1576
      %v1578 = vpop.xlane.xlu0 %1577
      %v1579 = vsel %vm444, %v1571, 0.0
      %1580 = vadd.xlane.f32.xlu0 %v1579
      %v1581 = vpop.xlane.xlu0 %1580
      %v1582 = vsel %vm444, %v1572, 0.0
      %1583 = vadd.xlane.f32.xlu0 %v1582
      %v1584 = vpop.xlane.xlu0 %1583
      %v1585 = vmul.f32 %v1575, %v1359
      %v1586 = vmul.f32 %v1578, %v1359
      %v1587 = vmul.f32 %v1581, %v1359
      %v1588 = vmul.f32 %v1584, %v1359
      %v1589 = vsub.f32 %v1569, %v1585
      %v1590 = vsub.f32 %v1570, %v1586
      %v1591 = vsub.f32 %v1571, %v1587
      %v1592 = vsub.f32 %v1572, %v1588
      %v1593 = vmul.f32 %v1589, %v1589
      %v1594 = vmul.f32 %v1590, %v1590
      %v1595 = vmul.f32 %v1591, %v1591
      %v1596 = vmul.f32 %v1592, %v1592
      %v1597 = vsel %vm444, %v1593, 0.0
      %1598 = vadd.xlane.f32.xlu0 %v1597
      %v1599 = vpop.xlane.xlu0 %1598
      %v1600 = vsel %vm444, %v1594, 0.0
      %1601 = vadd.xlane.f32.xlu0 %v1600
      %v1602 = vpop.xlane.xlu0 %1601
      %v1603 = vsel %vm444, %v1595, 0.0
      %1604 = vadd.xlane.f32.xlu0 %v1603
      %v1605 = vpop.xlane.xlu0 %1604
      %v1606 = vsel %vm444, %v1596, 0.0
      %1607 = vadd.xlane.f32.xlu0 %v1606
      %v1608 = vpop.xlane.xlu0 %1607
      %v1609 = vmul.f32 %v1599, %v1359
      %v1610 = vmul.f32 %v1602, %v1359
      %v1611 = vmul.f32 %v1605, %v1359
      %v1612 = vmul.f32 %v1608, %v1359
      %v1613 = vadd.f32 %v1609, 1e-12
      %v1614 = vadd.f32 %v1610, 1e-12
      %v1615 = vadd.f32 %v1611, 1e-12
      %v1616 = vadd.f32 %v1612, 1e-12
      %v1617 = vrsqrt.pop %v1613
      %v1618 = vmul.f32 %v1617, %v1613
      %v1619 = vmul.f32 %v1618, %v1617
      %v1620 = vmul.f32 0.5, %v1619
      %v1621 = vsub.f32 1.5, %v1620
      %v1622 = vmul.f32 %v1617, %v1621
      %vm1623 = vweird.f32 %v1613
      %vm1624 = vweird.f32 %v1617
      %vm1625 = vmor %vm1623, %vm1624
      %v1626 = vsel %vm1625, %v1617, %v1622
      %v1627 = vrsqrt.pop %v1614
      %v1628 = vmul.f32 %v1627, %v1614
      %v1629 = vmul.f32 %v1628, %v1627
      %v1630 = vmul.f32 0.5, %v1629
      %v1631 = vsub.f32 1.5, %v1630
      %v1632 = vmul.f32 %v1627, %v1631
      %vm1633 = vweird.f32 %v1614
      %vm1634 = vweird.f32 %v1627
      %vm1635 = vmor %vm1633, %vm1634
      %v1636 = vsel %vm1635, %v1627, %v1632
      %v1637 = vrsqrt.pop %v1615
      %v1638 = vmul.f32 %v1637, %v1615
      %v1639 = vmul.f32 %v1638, %v1637
      %v1640 = vmul.f32 0.5, %v1639
      %v1641 = vsub.f32 1.5, %v1640
      %v1642 = vmul.f32 %v1637, %v1641
      %vm1643 = vweird.f32 %v1615
      %vm1644 = vweird.f32 %v1637
      %vm1645 = vmor %vm1643, %vm1644
      %v1646 = vsel %vm1645, %v1637, %v1642
      %v1647 = vrsqrt.pop %v1616
      %v1648 = vmul.f32 %v1647, %v1616
      %v1649 = vmul.f32 %v1648, %v1647
      %v1650 = vmul.f32 0.5, %v1649
      %v1651 = vsub.f32 1.5, %v1650
      %v1652 = vmul.f32 %v1647, %v1651
      %vm1653 = vweird.f32 %v1616
      %vm1654 = vweird.f32 %v1647
      %vm1655 = vmor %vm1653, %vm1654
      %v1656 = vsel %vm1655, %v1647, %v1652
      %v1657 = vmul.f32 %v1589, %v1626
      %v1658 = vmul.f32 %v1590, %v1636
      %v1659 = vmul.f32 %v1591, %v1646
      %v1660 = vmul.f32 %v1592, %v1656
      %v1661 = vperm.slane %v434, 4
      %v1662 = vmul.f32 %v1657, %v1661
      %v1663 = vmul.f32 %v1658, %v1661
      %v1664 = vmul.f32 %v1659, %v1661
      %v1665 = vmul.f32 %v1660, %v1661
      %v1666 = vperm.slane %v434, 5
      %v1667 = vadd.f32 %v1662, %v1666
      %v1668 = vadd.f32 %v1663, %v1666
      %v1669 = vadd.f32 %v1664, %v1666
      %v1670 = vadd.f32 %v1665, %v1666
      %v1671 = vperm.slane %v434, 6
      %v1676 = vrot.slane %v1668, 7
      %vm1677 = vcmask 1041409
      %v1678 = vsel %vm1677, %v1676, %v1667
      %v1679 = vrot.slane %v1669, 6
      %vm1680 = vcmask 1042434
      %v1681 = vsel %vm1680, %v1679, %v1678
      %v1682 = vrot.slane %v1670, 5
      %vm1683 = vcmask 1043459
      %v1684 = vsel %vm1683, %v1682, %v1681
      %v1685 = vsel %vm444, %v1684, 0
      %1687 = vmatpush.msra.mxu0 0.0
      %1688 = vmatpush.msra.mxu0 0.0
      %1689 = vmatpush.msra.mxu0 0.0
      %1690 = vmatpush.msra.mxu0 0.0
      %1691 = vmatpush.msra.mxu0 0.0
      %1692 = vmatpush.msra.mxu0 0.0
      %1693 = vmatpush.msra.mxu0 0.0
      %1694 = vmatpush.msra.mxu0 0.0
      %1695 = vmatpush.msra.mxu0 0.0
      %1696 = vmatpush.msra.mxu0 0.0
      %1697 = vmatpush.msra.mxu0 0.0
      %1698 = vmatpush.msra.mxu0 0.0
      %1699 = vmatpush.msra.mxu0 %v433
      %1700 = vmatpush.msra.mxu0 %v432
      %1701 = vmatpush.msra.mxu0 %v431
      %1702 = vmatpush.msra.mxu0 %v430
      %1703 = vmatmul.f32.gmra.mxu0 %v1685
      %v1704 = vpop.f32.mrf.mxu0
      %v1705 = vadd.f32 %v1671, %v1704
      %1706 = vdwg.mxu0
      %v1707 = vtanh.pop %v1705
      %v1709 = vrot.slane %v1707, 1
      %v1710 = vrot.slane %v1707, 2
      %v1711 = vrot.slane %v1707, 3
      %vm1715 = vcmask 253952
      %1716 = vst.msk [vmem:[%s378] sm:$0x1] %vm1715, %v1707
      %1717 = vst.msk [vmem:[%s378 + $0x1] sm:$0x1] %vm1715, %v1709
      %1718 = vst.msk [vmem:[%s378 + $0x2] sm:$0x1] %vm1715, %v1710
      %1719 = vst.msk [vmem:[%s378 + $0x3] sm:$0x1] %vm1715, %v1711
      %s1720 = smul.u32 4, %s21
      %p1721 = scmp.lt.s32.totalorder %s1720, 7
      %s1722 = scalar_select %p1721, %s1720, 7
      %s1723 = scalar_lea.vmem %s10, %s1722
      // Predicated region
      $region61: #{_forward_flat_jit.1} parent=59 // pred_check
        %p1724 = pneg %p259
      $region62: #{_forward_flat_jit.1} parent=59 // pred_check_branch
        %1726 = sbr.rel (%p1724) target = $region64
      $region63: #{_forward_flat_jit.1} parent=59 // pred_region
        %s1727 = smul.u32 4, %s21
      $region64: #{_forward_flat_jit.1} parent=59 // pred_fallthru
        _
    $region60: #{_forward_flat_jit.1} parent=5 // pred_fallthru
      _
    %p1728 = scmp.le.s32.totalorder 2, %s16
    // Predicated region
    $region65: #{_forward_flat_jit.1} parent=5 // pred_check
      %p1729 = pneg %p1728
    $region66: #{_forward_flat_jit.1} parent=5 // pred_check_branch
      %1731 = sbr.rel (%p1729) target = $region68
    $region67: #{_forward_flat_jit.1} parent=5 // pred_region
      %s1732 = ssub.s32 %s16, 2
      // Predicated region
      $region69: #{_forward_flat_jit.1} parent=67 // pred_check
        %p1733 = pneg %p265
      $region70: #{_forward_flat_jit.1} parent=67 // pred_check_branch
        %1735 = sbr.rel (%p1733) target = $region72
      $region71: #{_forward_flat_jit.1} parent=67 // pred_region
        %s1736 = smul.u32 4, %s22
        %p1737 = scmp.lt.s32.totalorder %s1736, 7
        %s1738 = scalar_select %p1737, %s1736, 7
        %s1739 = scalar_lea.vmem %s10, %s1738
      $region72: #{_forward_flat_jit.1} parent=67 // pred_fallthru
        _
    $region68: #{_forward_flat_jit.1} parent=5 // pred_fallthru
      _
  $region6: #{_forward_flat_jit.1} parent=0 // loop_footer
    %s20 = sadd.s32 1, %s16
  $region7: #{_forward_flat_jit.1} parent=0 // loop_footer_branch
    %15 = sbr.rel target = $region3
  $region8: #{_forward_flat_jit.1} parent=0 // loop_exit
    _

</llo_original>
